<compile_context>
chip_gen: v7x
topology: tpu7x:2x2x1
jax: 0.10.0
libtpu: 0.0.40
codegen_flags: <defaults>
</compile_context>

<pallas_src>
import jax
import jax.numpy as jnp
from jax.experimental import pallas as pl
from jax.experimental.pallas import tpu as pltpu

KSIZE = 5
PAD = 2
N_LAYERS = 4                      # conv1..conv4 used in forward(); conv5 unused.
OFFS = (-2, -1, 1, 2)             # nonzero tap offsets for a 5-tap kernel.


def _round_up(x, m):
    return ((x + m - 1) // m) * m


def _make_kernel(PWp, rows):
    """Kernel for one packed block of shape (1, rows, PWp)."""

    def kernel(w_ref, b_ref, lane_mask_ref, row_mask_ref, x_ref, o_ref):
        cur = x_ref[0].astype(jnp.float32)                    # (rows, PWp)

        # Tiny precomputed boundary masks (broadcast at use sites).
        lane_m = {o: lane_mask_ref[k] for k, o in enumerate(OFFS)}  # (1, PWp)
        row_m = {o: row_mask_ref[k] for k, o in enumerate(OFFS)}    # (rows, 1)

        for layer in range(N_LAYERS):
            base = layer * KSIZE * KSIZE

            # 5 lane-shifted (dj) variants, computed once per layer.  Lane wrap
            # across packed-image boundaries is killed by the lane mask.
            shifted = []
            for dj in range(KSIZE):
                oj = dj - PAD
                if oj == 0:
                    shifted.append(cur)
                else:
                    s = pltpu.roll(cur, shift=(-oj) % PWp, axis=1)
                    shifted.append(s * lane_m[oj])

            # Per kernel row di: weighted sum over dj FIRST (no roll), then one
            # sublane roll + one row mask (roll distributes over the sum).
            total = None
            for di in range(KSIZE):
                oi = di - PAD
                acc = w_ref[base + di * KSIZE] * shifted[0]
                for dj in range(1, KSIZE):
                    acc = acc + w_ref[base + di * KSIZE + dj] * shifted[dj]
                if oi != 0:
                    acc = pltpu.roll(acc, shift=(-oi) % rows, axis=0)
                    acc = acc * row_m[oi]
                total = acc if total is None else total + acc

            cur = jnp.maximum(total + b_ref[layer], 0.0)      # bias + ReLU

        o_ref[0] = cur.astype(o_ref.dtype)

    return kernel


def conv_explainer_forward(x_nchw, weights, biases):
    """x_nchw: (N, 1, H, W); weights: (N_LAYERS, 5, 5); biases: (N_LAYERS,)."""
    assert x_nchw.shape[1] == 1, "convExplainer expects a single input channel"
    x = x_nchw[:, 0, :, :].astype(jnp.float32)                # (N, H, W)
    N, H, W = x.shape

    # --- layout parameters -------------------------------------------------
    P = max(1, 128 // W)            # images packed side-by-side along lanes
    PW = P * W
    PWp = _round_up(PW, 128)        # lane-dense (unmasked vst)
    Hp = _round_up(H, 8)            # sublane-aligned per-image height

    bytes_per_group = Hp * PWp * 4
    target_block = 1 << 20          # ~1 MiB per (rows, PWp) f32 block
    n_groups = -(-N // P)           # vertical stacks needed to cover the batch

    Gblk = max(1, target_block // bytes_per_group)
    Gblk = min(Gblk, n_groups)
    if n_groups >= 2:               # keep >=2 grid steps so both v7x TCs work
        Gblk = min(Gblk, -(-n_groups // 2))
    G2 = -(-n_groups // Gblk)       # number of grid steps
    Npad = G2 * Gblk * P
    rows = Gblk * Hp

    # --- pack: (N,H,W) -> (G2, Gblk*Hp, PWp) --------------------------------
    xpad = jnp.pad(x, ((0, Npad - N), (0, Hp - H), (0, 0)))
    xp = xpad.reshape(G2, Gblk, P, Hp, W).transpose(0, 1, 3, 2, 4)
    xp = xp.reshape(G2, rows, PW)
    if PWp != PW:
        xp = jnp.pad(xp, ((0, 0), (0, 0), (0, PWp - PW)))

    # --- scalars + tiny precomputed boundary masks --------------------------
    w_flat = weights.reshape(-1).astype(jnp.float32)          # (N_LAYERS*25,)
    b_flat = biases.reshape(-1).astype(jnp.float32)           # (N_LAYERS,)

    lane_c = jnp.concatenate(
        [jnp.tile(jnp.arange(W, dtype=jnp.int32), P),
         jnp.full((PWp - PW,), W, dtype=jnp.int32)])          # (PWp,)
    lane_mask = jnp.stack(
        [((lane_c + o >= 0) & (lane_c + o < W)).astype(jnp.float32)
         for o in OFFS]).reshape(len(OFFS), 1, PWp)

    row_r = jnp.tile(jnp.arange(Hp, dtype=jnp.int32), Gblk)   # (rows,)
    row_mask = jnp.stack(
        [((row_r + o >= 0) & (row_r + o < H)).astype(jnp.float32)
         for o in OFFS]).reshape(len(OFFS), rows, 1)

    # --- VMEM budget: 2x double-buffered in/out + ~7 live intermediates -----
    block_bytes = rows * PWp * 4
    vmem_limit = int(min(40 << 20, max(24 << 20, 12 * block_bytes + (2 << 20))))

    out = pl.pallas_call(
        _make_kernel(PWp, rows),
        out_shape=jax.ShapeDtypeStruct((G2, rows, PWp), jnp.float32),
        grid=(G2,),
        in_specs=[
            pl.BlockSpec(memory_space=pltpu.MemorySpace.SMEM),          # weights
            pl.BlockSpec(memory_space=pltpu.MemorySpace.SMEM),          # biases
            pl.BlockSpec((len(OFFS), 1, PWp), lambda g: (0, 0, 0)),     # lane masks
            pl.BlockSpec((len(OFFS), rows, 1), lambda g: (0, 0, 0)),    # row masks
            pl.BlockSpec((1, rows, PWp), lambda g: (g, 0, 0)),          # packed imgs
        ],
        out_specs=pl.BlockSpec((1, rows, PWp), lambda g: (g, 0, 0)),
        compiler_params=pltpu.CompilerParams(
            dimension_semantics=("parallel",),      # grid steps are independent
            vmem_limit_bytes=vmem_limit),
    )(w_flat, b_flat, lane_mask, row_mask, xp)

    # --- unpack back to (N, 1, H, W) ----------------------------------------
    y = out[:, :, :PW].reshape(G2, Gblk, Hp, P, W)
    y = y.transpose(0, 1, 3, 2, 4).reshape(Npad, Hp, W)[:N, :H, :]
    return y[:, None, :, :]


def _reference_forward(x_nchw, weights, biases):
    """Pure-JAX reference using lax.conv (NCHW, cross-correlation)."""
    y = x_nchw.astype(jnp.float32)
    for l in range(N_LAYERS):
        w = weights[l].reshape(1, 1, KSIZE, KSIZE).astype(jnp.float32)
        y = jax.lax.conv_general_dilated(
            y, w, window_strides=(1, 1), padding=((PAD, PAD), (PAD, PAD)),
            dimension_numbers=("NCHW", "OIHW", "NCHW"))
        y = jnp.maximum(y + biases[l], 0.0)
    return y


if __name__ == "__main__":
    key = jax.random.PRNGKey(0)
    kx, kw, kb = jax.random.split(key, 3)

    # PyTorch-style uniform(-1/sqrt(25), +1/sqrt(25)) parameter init.
    bound = 1.0 / (KSIZE * KSIZE) ** 0.5
    weights = jax.random.uniform(kw, (N_LAYERS, KSIZE, KSIZE),
                                 minval=-bound, maxval=bound, dtype=jnp.float32)
    biases = jax.random.uniform(kb, (N_LAYERS,),
                                minval=-bound, maxval=bound, dtype=jnp.float32)

    # Case 1: batch=2, 16x16 -- full 128-lane packing, single grid step.
    x1 = jax.random.normal(kx, (2, 1, 16, 16), dtype=jnp.float32)
    y1 = jax.block_until_ready(conv_explainer_forward(x1, weights, biases))
    assert y1.shape == (2, 1, 16, 16)
    assert jnp.allclose(y1, _reference_forward(x1, weights, biases),
                        atol=1e-4, rtol=1e-4), "mismatch vs reference (case 1)"

    # Case 2: batch=10, 8x16 -- two grid steps plus batch padding.
    x2 = jax.random.normal(jax.random.fold_in(kx, 1), (10, 1, 8, 16),
                           dtype=jnp.float32)
    y2 = jax.block_until_ready(conv_explainer_forward(x2, weights, biases))
    assert y2.shape == (10, 1, 8, 16)
    assert jnp.allclose(y2, _reference_forward(x2, weights, biases),
                        atol=1e-4, rtol=1e-4), "mismatch vs reference (case 2)"

    # Case 3: batch=5, 10x20 -- H not %8 and P*W not %128 (padding paths).
    x3 = jax.random.normal(jax.random.fold_in(kx, 2), (5, 1, 10, 20),
                           dtype=jnp.float32)
    y3 = jax.block_until_ready(conv_explainer_forward(x3, weights, biases))
    assert y3.shape == (5, 1, 10, 20)
    assert jnp.allclose(y3, _reference_forward(x3, weights, biases),
                        atol=1e-4, rtol=1e-4), "mismatch vs reference (case 3)"

    print("KERNEL_OK")
</pallas_src>

<mosaic_0001>
module attributes {stable_mosaic.version = 11 : i64} {
  func.func @kernel(%arg0: i32, %arg1: memref<100xf32, #tpu.memory_space<smem>>, %arg2: memref<4xf32, #tpu.memory_space<smem>>, %arg3: memref<4x1x128xf32, #tpu.memory_space<vmem>>, %arg4: memref<4x16x1xf32, #tpu.memory_space<vmem>>, %arg5: memref<1x16x128xf32, #tpu.memory_space<vmem>>, %arg6: memref<1x16x128xf32, #tpu.memory_space<vmem>>) attributes {dimension_semantics = [#tpu.dimension_semantics<parallel>], iteration_bounds = array<i64: 1>, scalar_prefetch = 0 : i64, scratch_operands = 0 : i64, tpu.core_type = #tpu.core_type<tc>, window_params = [{transform_indices = @transform_0, window_bounds = array<i64: 100>}, {transform_indices = @transform_1, window_bounds = array<i64: 4>}, {pipeline_mode = #tpu.pipeline_mode<synchronous>, transform_indices = @transform_2, window_bounds = array<i64: 4, 1, 128>}, {pipeline_mode = #tpu.pipeline_mode<synchronous>, transform_indices = @transform_3, window_bounds = array<i64: 4, 16, 1>}, {transform_indices = @transform_4, window_bounds = array<i64: 1, 16, 128>}, {transform_indices = @transform_5, window_bounds = array<i64: 1, 16, 128>}]} {
    %c0 = arith.constant 0 : index
    %c0_0 = arith.constant 0 : index
    %c0_1 = arith.constant 0 : index
    %0 = vector.load %arg5[%c0, %c0_0, %c0_1] : memref<1x16x128xf32, #tpu.memory_space<vmem>>, vector<1x16x128xf32>
    %1 = vector.shape_cast %0 : vector<1x16x128xf32> to vector<16x128xf32>
    %c0_2 = arith.constant 0 : index
    %c0_3 = arith.constant 0 : index
    %c0_4 = arith.constant 0 : index
    %2 = vector.load %arg3[%c0_2, %c0_3, %c0_4] : memref<4x1x128xf32, #tpu.memory_space<vmem>>, vector<1x1x128xf32>
    %3 = vector.shape_cast %2 : vector<1x1x128xf32> to vector<1x128xf32>
    %c1 = arith.constant 1 : index
    %c0_5 = arith.constant 0 : index
    %c0_6 = arith.constant 0 : index
    %4 = vector.load %arg3[%c1, %c0_5, %c0_6] : memref<4x1x128xf32, #tpu.memory_space<vmem>>, vector<1x1x128xf32>
    %5 = vector.shape_cast %4 : vector<1x1x128xf32> to vector<1x128xf32>
    %c2 = arith.constant 2 : index
    %c0_7 = arith.constant 0 : index
    %c0_8 = arith.constant 0 : index
    %6 = vector.load %arg3[%c2, %c0_7, %c0_8] : memref<4x1x128xf32, #tpu.memory_space<vmem>>, vector<1x1x128xf32>
    %7 = vector.shape_cast %6 : vector<1x1x128xf32> to vector<1x128xf32>
    %c3 = arith.constant 3 : index
    %c0_9 = arith.constant 0 : index
    %c0_10 = arith.constant 0 : index
    %8 = vector.load %arg3[%c3, %c0_9, %c0_10] : memref<4x1x128xf32, #tpu.memory_space<vmem>>, vector<1x1x128xf32>
    %9 = vector.shape_cast %8 : vector<1x1x128xf32> to vector<1x128xf32>
    %c0_11 = arith.constant 0 : index
    %c0_12 = arith.constant 0 : index
    %c0_13 = arith.constant 0 : index
    %10 = vector.load %arg4[%c0_11, %c0_12, %c0_13] : memref<4x16x1xf32, #tpu.memory_space<vmem>>, vector<1x16x1xf32>
    %11 = vector.shape_cast %10 : vector<1x16x1xf32> to vector<16x1xf32>
    %c1_14 = arith.constant 1 : index
    %c0_15 = arith.constant 0 : index
    %c0_16 = arith.constant 0 : index
    %12 = vector.load %arg4[%c1_14, %c0_15, %c0_16] : memref<4x16x1xf32, #tpu.memory_space<vmem>>, vector<1x16x1xf32>
    %13 = vector.shape_cast %12 : vector<1x16x1xf32> to vector<16x1xf32>
    %c2_17 = arith.constant 2 : index
    %c0_18 = arith.constant 0 : index
    %c0_19 = arith.constant 0 : index
    %14 = vector.load %arg4[%c2_17, %c0_18, %c0_19] : memref<4x16x1xf32, #tpu.memory_space<vmem>>, vector<1x16x1xf32>
    %15 = vector.shape_cast %14 : vector<1x16x1xf32> to vector<16x1xf32>
    %c3_20 = arith.constant 3 : index
    %c0_21 = arith.constant 0 : index
    %c0_22 = arith.constant 0 : index
    %16 = vector.load %arg4[%c3_20, %c0_21, %c0_22] : memref<4x16x1xf32, #tpu.memory_space<vmem>>, vector<1x16x1xf32>
    %17 = vector.shape_cast %16 : vector<1x16x1xf32> to vector<16x1xf32>
    %c2_i32 = arith.constant 2 : i32
    %18 = tpu.dynamic_rotate %1 by %c2_i32 dim 1 : vector<16x128xf32>, i32 -> vector<16x128xf32>
    %19 = vector.broadcast %3 : vector<1x128xf32> to vector<16x128xf32>
    %20 = arith.mulf %18, %19 : vector<16x128xf32>
    %c1_i32 = arith.constant 1 : i32
    %21 = tpu.dynamic_rotate %1 by %c1_i32 dim 1 : vector<16x128xf32>, i32 -> vector<16x128xf32>
    %22 = vector.broadcast %5 : vector<1x128xf32> to vector<16x128xf32>
    %23 = arith.mulf %21, %22 : vector<16x128xf32>
    %c127_i32 = arith.constant 127 : i32
    %24 = tpu.dynamic_rotate %1 by %c127_i32 dim 1 : vector<16x128xf32>, i32 -> vector<16x128xf32>
    %25 = vector.broadcast %7 : vector<1x128xf32> to vector<16x128xf32>
    %26 = arith.mulf %24, %25 : vector<16x128xf32>
    %c126_i32 = arith.constant 126 : i32
    %27 = tpu.dynamic_rotate %1 by %c126_i32 dim 1 : vector<16x128xf32>, i32 -> vector<16x128xf32>
    %28 = vector.broadcast %9 : vector<1x128xf32> to vector<16x128xf32>
    %29 = arith.mulf %27, %28 : vector<16x128xf32>
    %c0_23 = arith.constant 0 : index
    %30 = memref.load %arg1[%c0_23] : memref<100xf32, #tpu.memory_space<smem>>
    %31 = vector.broadcast %30 : f32 to vector<16x128xf32>
    %32 = arith.mulf %31, %20 : vector<16x128xf32>
    %c1_24 = arith.constant 1 : index
    %33 = memref.load %arg1[%c1_24] : memref<100xf32, #tpu.memory_space<smem>>
    %34 = vector.broadcast %33 : f32 to vector<16x128xf32>
    %35 = arith.mulf %34, %23 : vector<16x128xf32>
    %36 = arith.addf %32, %35 : vector<16x128xf32>
    %c2_25 = arith.constant 2 : index
    %37 = memref.load %arg1[%c2_25] : memref<100xf32, #tpu.memory_space<smem>>
    %38 = vector.broadcast %37 : f32 to vector<16x128xf32>
    %39 = arith.mulf %38, %1 : vector<16x128xf32>
    %40 = arith.addf %36, %39 : vector<16x128xf32>
    %c3_26 = arith.constant 3 : index
    %41 = memref.load %arg1[%c3_26] : memref<100xf32, #tpu.memory_space<smem>>
    %42 = vector.broadcast %41 : f32 to vector<16x128xf32>
    %43 = arith.mulf %42, %26 : vector<16x128xf32>
    %44 = arith.addf %40, %43 : vector<16x128xf32>
    %c4 = arith.constant 4 : index
    %45 = memref.load %arg1[%c4] : memref<100xf32, #tpu.memory_space<smem>>
    %46 = vector.broadcast %45 : f32 to vector<16x128xf32>
    %47 = arith.mulf %46, %29 : vector<16x128xf32>
    %48 = arith.addf %44, %47 : vector<16x128xf32>
    %c2_i32_27 = arith.constant 2 : i32
    %49 = tpu.dynamic_rotate %48 by %c2_i32_27 dim 0 : vector<16x128xf32>, i32 -> vector<16x128xf32>
    %50 = vector.broadcast %11 : vector<16x1xf32> to vector<16x128xf32>
    %51 = arith.mulf %49, %50 : vector<16x128xf32>
    %c5 = arith.constant 5 : index
    %52 = memref.load %arg1[%c5] : memref<100xf32, #tpu.memory_space<smem>>
    %53 = vector.broadcast %52 : f32 to vector<16x128xf32>
    %54 = arith.mulf %53, %20 : vector<16x128xf32>
    %c6 = arith.constant 6 : index
    %55 = memref.load %arg1[%c6] : memref<100xf32, #tpu.memory_space<smem>>
    %56 = vector.broadcast %55 : f32 to vector<16x128xf32>
    %57 = arith.mulf %56, %23 : vector<16x128xf32>
    %58 = arith.addf %54, %57 : vector<16x128xf32>
    %c7 = arith.constant 7 : index
    %59 = memref.load %arg1[%c7] : memref<100xf32, #tpu.memory_space<smem>>
    %60 = vector.broadcast %59 : f32 to vector<16x128xf32>
    %61 = arith.mulf %60, %1 : vector<16x128xf32>
    %62 = arith.addf %58, %61 : vector<16x128xf32>
    %c8 = arith.constant 8 : index
    %63 = memref.load %arg1[%c8] : memref<100xf32, #tpu.memory_space<smem>>
    %64 = vector.broadcast %63 : f32 to vector<16x128xf32>
    %65 = arith.mulf %64, %26 : vector<16x128xf32>
    %66 = arith.addf %62, %65 : vector<16x128xf32>
    %c9 = arith.constant 9 : index
    %67 = memref.load %arg1[%c9] : memref<100xf32, #tpu.memory_space<smem>>
    %68 = vector.broadcast %67 : f32 to vector<16x128xf32>
    %69 = arith.mulf %68, %29 : vector<16x128xf32>
    %70 = arith.addf %66, %69 : vector<16x128xf32>
    %c1_i32_28 = arith.constant 1 : i32
    %71 = tpu.dynamic_rotate %70 by %c1_i32_28 dim 0 : vector<16x128xf32>, i32 -> vector<16x128xf32>
    %72 = vector.broadcast %13 : vector<16x1xf32> to vector<16x128xf32>
    %73 = arith.mulf %71, %72 : vector<16x128xf32>
    %74 = arith.addf %51, %73 : vector<16x128xf32>
    %c10 = arith.constant 10 : index
    %75 = memref.load %arg1[%c10] : memref<100xf32, #tpu.memory_space<smem>>
    %76 = vector.broadcast %75 : f32 to vector<16x128xf32>
    %77 = arith.mulf %76, %20 : vector<16x128xf32>
    %c11 = arith.constant 11 : index
    %78 = memref.load %arg1[%c11] : memref<100xf32, #tpu.memory_space<smem>>
    %79 = vector.broadcast %78 : f32 to vector<16x128xf32>
    %80 = arith.mulf %79, %23 : vector<16x128xf32>
    %81 = arith.addf %77, %80 : vector<16x128xf32>
    %c12 = arith.constant 12 : index
    %82 = memref.load %arg1[%c12] : memref<100xf32, #tpu.memory_space<smem>>
    %83 = vector.broadcast %82 : f32 to vector<16x128xf32>
    %84 = arith.mulf %83, %1 : vector<16x128xf32>
    %85 = arith.addf %81, %84 : vector<16x128xf32>
    %c13 = arith.constant 13 : index
    %86 = memref.load %arg1[%c13] : memref<100xf32, #tpu.memory_space<smem>>
    %87 = vector.broadcast %86 : f32 to vector<16x128xf32>
    %88 = arith.mulf %87, %26 : vector<16x128xf32>
    %89 = arith.addf %85, %88 : vector<16x128xf32>
    %c14 = arith.constant 14 : index
    %90 = memref.load %arg1[%c14] : memref<100xf32, #tpu.memory_space<smem>>
    %91 = vector.broadcast %90 : f32 to vector<16x128xf32>
    %92 = arith.mulf %91, %29 : vector<16x128xf32>
    %93 = arith.addf %89, %92 : vector<16x128xf32>
    %94 = arith.addf %74, %93 : vector<16x128xf32>
    %c15 = arith.constant 15 : index
    %95 = memref.load %arg1[%c15] : memref<100xf32, #tpu.memory_space<smem>>
    %96 = vector.broadcast %95 : f32 to vector<16x128xf32>
    %97 = arith.mulf %96, %20 : vector<16x128xf32>
    %c16 = arith.constant 16 : index
    %98 = memref.load %arg1[%c16] : memref<100xf32, #tpu.memory_space<smem>>
    %99 = vector.broadcast %98 : f32 to vector<16x128xf32>
    %100 = arith.mulf %99, %23 : vector<16x128xf32>
    %101 = arith.addf %97, %100 : vector<16x128xf32>
    %c17 = arith.constant 17 : index
    %102 = memref.load %arg1[%c17] : memref<100xf32, #tpu.memory_space<smem>>
    %103 = vector.broadcast %102 : f32 to vector<16x128xf32>
    %104 = arith.mulf %103, %1 : vector<16x128xf32>
    %105 = arith.addf %101, %104 : vector<16x128xf32>
    %c18 = arith.constant 18 : index
    %106 = memref.load %arg1[%c18] : memref<100xf32, #tpu.memory_space<smem>>
    %107 = vector.broadcast %106 : f32 to vector<16x128xf32>
    %108 = arith.mulf %107, %26 : vector<16x128xf32>
    %109 = arith.addf %105, %108 : vector<16x128xf32>
    %c19 = arith.constant 19 : index
    %110 = memref.load %arg1[%c19] : memref<100xf32, #tpu.memory_space<smem>>
    %111 = vector.broadcast %110 : f32 to vector<16x128xf32>
    %112 = arith.mulf %111, %29 : vector<16x128xf32>
    %113 = arith.addf %109, %112 : vector<16x128xf32>
    %c15_i32 = arith.constant 15 : i32
    %114 = tpu.dynamic_rotate %113 by %c15_i32 dim 0 : vector<16x128xf32>, i32 -> vector<16x128xf32>
    %115 = vector.broadcast %15 : vector<16x1xf32> to vector<16x128xf32>
    %116 = arith.mulf %114, %115 : vector<16x128xf32>
    %117 = arith.addf %94, %116 : vector<16x128xf32>
    %c20 = arith.constant 20 : index
    %118 = memref.load %arg1[%c20] : memref<100xf32, #tpu.memory_space<smem>>
    %119 = vector.broadcast %118 : f32 to vector<16x128xf32>
    %120 = arith.mulf %119, %20 : vector<16x128xf32>
    %c21 = arith.constant 21 : index
    %121 = memref.load %arg1[%c21] : memref<100xf32, #tpu.memory_space<smem>>
    %122 = vector.broadcast %121 : f32 to vector<16x128xf32>
    %123 = arith.mulf %122, %23 : vector<16x128xf32>
    %124 = arith.addf %120, %123 : vector<16x128xf32>
    %c22 = arith.constant 22 : index
    %125 = memref.load %arg1[%c22] : memref<100xf32, #tpu.memory_space<smem>>
    %126 = vector.broadcast %125 : f32 to vector<16x128xf32>
    %127 = arith.mulf %126, %1 : vector<16x128xf32>
    %128 = arith.addf %124, %127 : vector<16x128xf32>
    %c23 = arith.constant 23 : index
    %129 = memref.load %arg1[%c23] : memref<100xf32, #tpu.memory_space<smem>>
    %130 = vector.broadcast %129 : f32 to vector<16x128xf32>
    %131 = arith.mulf %130, %26 : vector<16x128xf32>
    %132 = arith.addf %128, %131 : vector<16x128xf32>
    %c24 = arith.constant 24 : index
    %133 = memref.load %arg1[%c24] : memref<100xf32, #tpu.memory_space<smem>>
    %134 = vector.broadcast %133 : f32 to vector<16x128xf32>
    %135 = arith.mulf %134, %29 : vector<16x128xf32>
    %136 = arith.addf %132, %135 : vector<16x128xf32>
    %c14_i32 = arith.constant 14 : i32
    %137 = tpu.dynamic_rotate %136 by %c14_i32 dim 0 : vector<16x128xf32>, i32 -> vector<16x128xf32>
    %138 = vector.broadcast %17 : vector<16x1xf32> to vector<16x128xf32>
    %139 = arith.mulf %137, %138 : vector<16x128xf32>
    %140 = arith.addf %117, %139 : vector<16x128xf32>
    %c0_29 = arith.constant 0 : index
    %141 = memref.load %arg2[%c0_29] : memref<4xf32, #tpu.memory_space<smem>>
    %142 = vector.broadcast %141 : f32 to vector<16x128xf32>
    %143 = arith.addf %140, %142 : vector<16x128xf32>
    %cst = arith.constant 0.000000e+00 : f32
    %144 = vector.broadcast %cst : f32 to vector<16x128xf32>
    %145 = arith.maximumf %143, %144 : vector<16x128xf32>
    %c2_i32_30 = arith.constant 2 : i32
    %146 = tpu.dynamic_rotate %145 by %c2_i32_30 dim 1 : vector<16x128xf32>, i32 -> vector<16x128xf32>
    %147 = vector.broadcast %3 : vector<1x128xf32> to vector<16x128xf32>
    %148 = arith.mulf %146, %147 : vector<16x128xf32>
    %c1_i32_31 = arith.constant 1 : i32
    %149 = tpu.dynamic_rotate %145 by %c1_i32_31 dim 1 : vector<16x128xf32>, i32 -> vector<16x128xf32>
    %150 = vector.broadcast %5 : vector<1x128xf32> to vector<16x128xf32>
    %151 = arith.mulf %149, %150 : vector<16x128xf32>
    %c127_i32_32 = arith.constant 127 : i32
    %152 = tpu.dynamic_rotate %145 by %c127_i32_32 dim 1 : vector<16x128xf32>, i32 -> vector<16x128xf32>
    %153 = vector.broadcast %7 : vector<1x128xf32> to vector<16x128xf32>
    %154 = arith.mulf %152, %153 : vector<16x128xf32>
    %c126_i32_33 = arith.constant 126 : i32
    %155 = tpu.dynamic_rotate %145 by %c126_i32_33 dim 1 : vector<16x128xf32>, i32 -> vector<16x128xf32>
    %156 = vector.broadcast %9 : vector<1x128xf32> to vector<16x128xf32>
    %157 = arith.mulf %155, %156 : vector<16x128xf32>
    %c25 = arith.constant 25 : index
    %158 = memref.load %arg1[%c25] : memref<100xf32, #tpu.memory_space<smem>>
    %159 = vector.broadcast %158 : f32 to vector<16x128xf32>
    %160 = arith.mulf %159, %148 : vector<16x128xf32>
    %c26 = arith.constant 26 : index
    %161 = memref.load %arg1[%c26] : memref<100xf32, #tpu.memory_space<smem>>
    %162 = vector.broadcast %161 : f32 to vector<16x128xf32>
    %163 = arith.mulf %162, %151 : vector<16x128xf32>
    %164 = arith.addf %160, %163 : vector<16x128xf32>
    %c27 = arith.constant 27 : index
    %165 = memref.load %arg1[%c27] : memref<100xf32, #tpu.memory_space<smem>>
    %166 = vector.broadcast %165 : f32 to vector<16x128xf32>
    %167 = arith.mulf %166, %145 : vector<16x128xf32>
    %168 = arith.addf %164, %167 : vector<16x128xf32>
    %c28 = arith.constant 28 : index
    %169 = memref.load %arg1[%c28] : memref<100xf32, #tpu.memory_space<smem>>
    %170 = vector.broadcast %169 : f32 to vector<16x128xf32>
    %171 = arith.mulf %170, %154 : vector<16x128xf32>
    %172 = arith.addf %168, %171 : vector<16x128xf32>
    %c29 = arith.constant 29 : index
    %173 = memref.load %arg1[%c29] : memref<100xf32, #tpu.memory_space<smem>>
    %174 = vector.broadcast %173 : f32 to vector<16x128xf32>
    %175 = arith.mulf %174, %157 : vector<16x128xf32>
    %176 = arith.addf %172, %175 : vector<16x128xf32>
    %c2_i32_34 = arith.constant 2 : i32
    %177 = tpu.dynamic_rotate %176 by %c2_i32_34 dim 0 : vector<16x128xf32>, i32 -> vector<16x128xf32>
    %178 = vector.broadcast %11 : vector<16x1xf32> to vector<16x128xf32>
    %179 = arith.mulf %177, %178 : vector<16x128xf32>
    %c30 = arith.constant 30 : index
    %180 = memref.load %arg1[%c30] : memref<100xf32, #tpu.memory_space<smem>>
    %181 = vector.broadcast %180 : f32 to vector<16x128xf32>
    %182 = arith.mulf %181, %148 : vector<16x128xf32>
    %c31 = arith.constant 31 : index
    %183 = memref.load %arg1[%c31] : memref<100xf32, #tpu.memory_space<smem>>
    %184 = vector.broadcast %183 : f32 to vector<16x128xf32>
    %185 = arith.mulf %184, %151 : vector<16x128xf32>
    %186 = arith.addf %182, %185 : vector<16x128xf32>
    %c32 = arith.constant 32 : index
    %187 = memref.load %arg1[%c32] : memref<100xf32, #tpu.memory_space<smem>>
    %188 = vector.broadcast %187 : f32 to vector<16x128xf32>
    %189 = arith.mulf %188, %145 : vector<16x128xf32>
    %190 = arith.addf %186, %189 : vector<16x128xf32>
    %c33 = arith.constant 33 : index
    %191 = memref.load %arg1[%c33] : memref<100xf32, #tpu.memory_space<smem>>
    %192 = vector.broadcast %191 : f32 to vector<16x128xf32>
    %193 = arith.mulf %192, %154 : vector<16x128xf32>
    %194 = arith.addf %190, %193 : vector<16x128xf32>
    %c34 = arith.constant 34 : index
    %195 = memref.load %arg1[%c34] : memref<100xf32, #tpu.memory_space<smem>>
    %196 = vector.broadcast %195 : f32 to vector<16x128xf32>
    %197 = arith.mulf %196, %157 : vector<16x128xf32>
    %198 = arith.addf %194, %197 : vector<16x128xf32>
    %c1_i32_35 = arith.constant 1 : i32
    %199 = tpu.dynamic_rotate %198 by %c1_i32_35 dim 0 : vector<16x128xf32>, i32 -> vector<16x128xf32>
    %200 = vector.broadcast %13 : vector<16x1xf32> to vector<16x128xf32>
    %201 = arith.mulf %199, %200 : vector<16x128xf32>
    %202 = arith.addf %179, %201 : vector<16x128xf32>
    %c35 = arith.constant 35 : index
    %203 = memref.load %arg1[%c35] : memref<100xf32, #tpu.memory_space<smem>>
    %204 = vector.broadcast %203 : f32 to vector<16x128xf32>
    %205 = arith.mulf %204, %148 : vector<16x128xf32>
    %c36 = arith.constant 36 : index
    %206 = memref.load %arg1[%c36] : memref<100xf32, #tpu.memory_space<smem>>
    %207 = vector.broadcast %206 : f32 to vector<16x128xf32>
    %208 = arith.mulf %207, %151 : vector<16x128xf32>
    %209 = arith.addf %205, %208 : vector<16x128xf32>
    %c37 = arith.constant 37 : index
    %210 = memref.load %arg1[%c37] : memref<100xf32, #tpu.memory_space<smem>>
    %211 = vector.broadcast %210 : f32 to vector<16x128xf32>
    %212 = arith.mulf %211, %145 : vector<16x128xf32>
    %213 = arith.addf %209, %212 : vector<16x128xf32>
    %c38 = arith.constant 38 : index
    %214 = memref.load %arg1[%c38] : memref<100xf32, #tpu.memory_space<smem>>
    %215 = vector.broadcast %214 : f32 to vector<16x128xf32>
    %216 = arith.mulf %215, %154 : vector<16x128xf32>
    %217 = arith.addf %213, %216 : vector<16x128xf32>
    %c39 = arith.constant 39 : index
    %218 = memref.load %arg1[%c39] : memref<100xf32, #tpu.memory_space<smem>>
    %219 = vector.broadcast %218 : f32 to vector<16x128xf32>
    %220 = arith.mulf %219, %157 : vector<16x128xf32>
    %221 = arith.addf %217, %220 : vector<16x128xf32>
    %222 = arith.addf %202, %221 : vector<16x128xf32>
    %c40 = arith.constant 40 : index
    %223 = memref.load %arg1[%c40] : memref<100xf32, #tpu.memory_space<smem>>
    %224 = vector.broadcast %223 : f32 to vector<16x128xf32>
    %225 = arith.mulf %224, %148 : vector<16x128xf32>
    %c41 = arith.constant 41 : index
    %226 = memref.load %arg1[%c41] : memref<100xf32, #tpu.memory_space<smem>>
    %227 = vector.broadcast %226 : f32 to vector<16x128xf32>
    %228 = arith.mulf %227, %151 : vector<16x128xf32>
    %229 = arith.addf %225, %228 : vector<16x128xf32>
    %c42 = arith.constant 42 : index
    %230 = memref.load %arg1[%c42] : memref<100xf32, #tpu.memory_space<smem>>
    %231 = vector.broadcast %230 : f32 to vector<16x128xf32>
    %232 = arith.mulf %231, %145 : vector<16x128xf32>
    %233 = arith.addf %229, %232 : vector<16x128xf32>
    %c43 = arith.constant 43 : index
    %234 = memref.load %arg1[%c43] : memref<100xf32, #tpu.memory_space<smem>>
    %235 = vector.broadcast %234 : f32 to vector<16x128xf32>
    %236 = arith.mulf %235, %154 : vector<16x128xf32>
    %237 = arith.addf %233, %236 : vector<16x128xf32>
    %c44 = arith.constant 44 : index
    %238 = memref.load %arg1[%c44] : memref<100xf32, #tpu.memory_space<smem>>
    %239 = vector.broadcast %238 : f32 to vector<16x128xf32>
    %240 = arith.mulf %239, %157 : vector<16x128xf32>
    %241 = arith.addf %237, %240 : vector<16x128xf32>
    %c15_i32_36 = arith.constant 15 : i32
    %242 = tpu.dynamic_rotate %241 by %c15_i32_36 dim 0 : vector<16x128xf32>, i32 -> vector<16x128xf32>
    %243 = vector.broadcast %15 : vector<16x1xf32> to vector<16x128xf32>
    %244 = arith.mulf %242, %243 : vector<16x128xf32>
    %245 = arith.addf %222, %244 : vector<16x128xf32>
    %c45 = arith.constant 45 : index
    %246 = memref.load %arg1[%c45] : memref<100xf32, #tpu.memory_space<smem>>
    %247 = vector.broadcast %246 : f32 to vector<16x128xf32>
    %248 = arith.mulf %247, %148 : vector<16x128xf32>
    %c46 = arith.constant 46 : index
    %249 = memref.load %arg1[%c46] : memref<100xf32, #tpu.memory_space<smem>>
    %250 = vector.broadcast %249 : f32 to vector<16x128xf32>
    %251 = arith.mulf %250, %151 : vector<16x128xf32>
    %252 = arith.addf %248, %251 : vector<16x128xf32>
    %c47 = arith.constant 47 : index
    %253 = memref.load %arg1[%c47] : memref<100xf32, #tpu.memory_space<smem>>
    %254 = vector.broadcast %253 : f32 to vector<16x128xf32>
    %255 = arith.mulf %254, %145 : vector<16x128xf32>
    %256 = arith.addf %252, %255 : vector<16x128xf32>
    %c48 = arith.constant 48 : index
    %257 = memref.load %arg1[%c48] : memref<100xf32, #tpu.memory_space<smem>>
    %258 = vector.broadcast %257 : f32 to vector<16x128xf32>
    %259 = arith.mulf %258, %154 : vector<16x128xf32>
    %260 = arith.addf %256, %259 : vector<16x128xf32>
    %c49 = arith.constant 49 : index
    %261 = memref.load %arg1[%c49] : memref<100xf32, #tpu.memory_space<smem>>
    %262 = vector.broadcast %261 : f32 to vector<16x128xf32>
    %263 = arith.mulf %262, %157 : vector<16x128xf32>
    %264 = arith.addf %260, %263 : vector<16x128xf32>
    %c14_i32_37 = arith.constant 14 : i32
    %265 = tpu.dynamic_rotate %264 by %c14_i32_37 dim 0 : vector<16x128xf32>, i32 -> vector<16x128xf32>
    %266 = vector.broadcast %17 : vector<16x1xf32> to vector<16x128xf32>
    %267 = arith.mulf %265, %266 : vector<16x128xf32>
    %268 = arith.addf %245, %267 : vector<16x128xf32>
    %c1_38 = arith.constant 1 : index
    %269 = memref.load %arg2[%c1_38] : memref<4xf32, #tpu.memory_space<smem>>
    %270 = vector.broadcast %269 : f32 to vector<16x128xf32>
    %271 = arith.addf %268, %270 : vector<16x128xf32>
    %cst_39 = arith.constant 0.000000e+00 : f32
    %272 = vector.broadcast %cst_39 : f32 to vector<16x128xf32>
    %273 = arith.maximumf %271, %272 : vector<16x128xf32>
    %c2_i32_40 = arith.constant 2 : i32
    %274 = tpu.dynamic_rotate %273 by %c2_i32_40 dim 1 : vector<16x128xf32>, i32 -> vector<16x128xf32>
    %275 = vector.broadcast %3 : vector<1x128xf32> to vector<16x128xf32>
    %276 = arith.mulf %274, %275 : vector<16x128xf32>
    %c1_i32_41 = arith.constant 1 : i32
    %277 = tpu.dynamic_rotate %273 by %c1_i32_41 dim 1 : vector<16x128xf32>, i32 -> vector<16x128xf32>
    %278 = vector.broadcast %5 : vector<1x128xf32> to vector<16x128xf32>
    %279 = arith.mulf %277, %278 : vector<16x128xf32>
    %c127_i32_42 = arith.constant 127 : i32
    %280 = tpu.dynamic_rotate %273 by %c127_i32_42 dim 1 : vector<16x128xf32>, i32 -> vector<16x128xf32>
    %281 = vector.broadcast %7 : vector<1x128xf32> to vector<16x128xf32>
    %282 = arith.mulf %280, %281 : vector<16x128xf32>
    %c126_i32_43 = arith.constant 126 : i32
    %283 = tpu.dynamic_rotate %273 by %c126_i32_43 dim 1 : vector<16x128xf32>, i32 -> vector<16x128xf32>
    %284 = vector.broadcast %9 : vector<1x128xf32> to vector<16x128xf32>
    %285 = arith.mulf %283, %284 : vector<16x128xf32>
    %c50 = arith.constant 50 : index
    %286 = memref.load %arg1[%c50] : memref<100xf32, #tpu.memory_space<smem>>
    %287 = vector.broadcast %286 : f32 to vector<16x128xf32>
    %288 = arith.mulf %287, %276 : vector<16x128xf32>
    %c51 = arith.constant 51 : index
    %289 = memref.load %arg1[%c51] : memref<100xf32, #tpu.memory_space<smem>>
    %290 = vector.broadcast %289 : f32 to vector<16x128xf32>
    %291 = arith.mulf %290, %279 : vector<16x128xf32>
    %292 = arith.addf %288, %291 : vector<16x128xf32>
    %c52 = arith.constant 52 : index
    %293 = memref.load %arg1[%c52] : memref<100xf32, #tpu.memory_space<smem>>
    %294 = vector.broadcast %293 : f32 to vector<16x128xf32>
    %295 = arith.mulf %294, %273 : vector<16x128xf32>
    %296 = arith.addf %292, %295 : vector<16x128xf32>
    %c53 = arith.constant 53 : index
    %297 = memref.load %arg1[%c53] : memref<100xf32, #tpu.memory_space<smem>>
    %298 = vector.broadcast %297 : f32 to vector<16x128xf32>
    %299 = arith.mulf %298, %282 : vector<16x128xf32>
    %300 = arith.addf %296, %299 : vector<16x128xf32>
    %c54 = arith.constant 54 : index
    %301 = memref.load %arg1[%c54] : memref<100xf32, #tpu.memory_space<smem>>
    %302 = vector.broadcast %301 : f32 to vector<16x128xf32>
    %303 = arith.mulf %302, %285 : vector<16x128xf32>
    %304 = arith.addf %300, %303 : vector<16x128xf32>
    %c2_i32_44 = arith.constant 2 : i32
    %305 = tpu.dynamic_rotate %304 by %c2_i32_44 dim 0 : vector<16x128xf32>, i32 -> vector<16x128xf32>
    %306 = vector.broadcast %11 : vector<16x1xf32> to vector<16x128xf32>
    %307 = arith.mulf %305, %306 : vector<16x128xf32>
    %c55 = arith.constant 55 : index
    %308 = memref.load %arg1[%c55] : memref<100xf32, #tpu.memory_space<smem>>
    %309 = vector.broadcast %308 : f32 to vector<16x128xf32>
    %310 = arith.mulf %309, %276 : vector<16x128xf32>
    %c56 = arith.constant 56 : index
    %311 = memref.load %arg1[%c56] : memref<100xf32, #tpu.memory_space<smem>>
    %312 = vector.broadcast %311 : f32 to vector<16x128xf32>
    %313 = arith.mulf %312, %279 : vector<16x128xf32>
    %314 = arith.addf %310, %313 : vector<16x128xf32>
    %c57 = arith.constant 57 : index
    %315 = memref.load %arg1[%c57] : memref<100xf32, #tpu.memory_space<smem>>
    %316 = vector.broadcast %315 : f32 to vector<16x128xf32>
    %317 = arith.mulf %316, %273 : vector<16x128xf32>
    %318 = arith.addf %314, %317 : vector<16x128xf32>
    %c58 = arith.constant 58 : index
    %319 = memref.load %arg1[%c58] : memref<100xf32, #tpu.memory_space<smem>>
    %320 = vector.broadcast %319 : f32 to vector<16x128xf32>
    %321 = arith.mulf %320, %282 : vector<16x128xf32>
    %322 = arith.addf %318, %321 : vector<16x128xf32>
    %c59 = arith.constant 59 : index
    %323 = memref.load %arg1[%c59] : memref<100xf32, #tpu.memory_space<smem>>
    %324 = vector.broadcast %323 : f32 to vector<16x128xf32>
    %325 = arith.mulf %324, %285 : vector<16x128xf32>
    %326 = arith.addf %322, %325 : vector<16x128xf32>
    %c1_i32_45 = arith.constant 1 : i32
    %327 = tpu.dynamic_rotate %326 by %c1_i32_45 dim 0 : vector<16x128xf32>, i32 -> vector<16x128xf32>
    %328 = vector.broadcast %13 : vector<16x1xf32> to vector<16x128xf32>
    %329 = arith.mulf %327, %328 : vector<16x128xf32>
    %330 = arith.addf %307, %329 : vector<16x128xf32>
    %c60 = arith.constant 60 : index
    %331 = memref.load %arg1[%c60] : memref<100xf32, #tpu.memory_space<smem>>
    %332 = vector.broadcast %331 : f32 to vector<16x128xf32>
    %333 = arith.mulf %332, %276 : vector<16x128xf32>
    %c61 = arith.constant 61 : index
    %334 = memref.load %arg1[%c61] : memref<100xf32, #tpu.memory_space<smem>>
    %335 = vector.broadcast %334 : f32 to vector<16x128xf32>
    %336 = arith.mulf %335, %279 : vector<16x128xf32>
    %337 = arith.addf %333, %336 : vector<16x128xf32>
    %c62 = arith.constant 62 : index
    %338 = memref.load %arg1[%c62] : memref<100xf32, #tpu.memory_space<smem>>
    %339 = vector.broadcast %338 : f32 to vector<16x128xf32>
    %340 = arith.mulf %339, %273 : vector<16x128xf32>
    %341 = arith.addf %337, %340 : vector<16x128xf32>
    %c63 = arith.constant 63 : index
    %342 = memref.load %arg1[%c63] : memref<100xf32, #tpu.memory_space<smem>>
    %343 = vector.broadcast %342 : f32 to vector<16x128xf32>
    %344 = arith.mulf %343, %282 : vector<16x128xf32>
    %345 = arith.addf %341, %344 : vector<16x128xf32>
    %c64 = arith.constant 64 : index
    %346 = memref.load %arg1[%c64] : memref<100xf32, #tpu.memory_space<smem>>
    %347 = vector.broadcast %346 : f32 to vector<16x128xf32>
    %348 = arith.mulf %347, %285 : vector<16x128xf32>
    %349 = arith.addf %345, %348 : vector<16x128xf32>
    %350 = arith.addf %330, %349 : vector<16x128xf32>
    %c65 = arith.constant 65 : index
    %351 = memref.load %arg1[%c65] : memref<100xf32, #tpu.memory_space<smem>>
    %352 = vector.broadcast %351 : f32 to vector<16x128xf32>
    %353 = arith.mulf %352, %276 : vector<16x128xf32>
    %c66 = arith.constant 66 : index
    %354 = memref.load %arg1[%c66] : memref<100xf32, #tpu.memory_space<smem>>
    %355 = vector.broadcast %354 : f32 to vector<16x128xf32>
    %356 = arith.mulf %355, %279 : vector<16x128xf32>
    %357 = arith.addf %353, %356 : vector<16x128xf32>
    %c67 = arith.constant 67 : index
    %358 = memref.load %arg1[%c67] : memref<100xf32, #tpu.memory_space<smem>>
    %359 = vector.broadcast %358 : f32 to vector<16x128xf32>
    %360 = arith.mulf %359, %273 : vector<16x128xf32>
    %361 = arith.addf %357, %360 : vector<16x128xf32>
    %c68 = arith.constant 68 : index
    %362 = memref.load %arg1[%c68] : memref<100xf32, #tpu.memory_space<smem>>
    %363 = vector.broadcast %362 : f32 to vector<16x128xf32>
    %364 = arith.mulf %363, %282 : vector<16x128xf32>
    %365 = arith.addf %361, %364 : vector<16x128xf32>
    %c69 = arith.constant 69 : index
    %366 = memref.load %arg1[%c69] : memref<100xf32, #tpu.memory_space<smem>>
    %367 = vector.broadcast %366 : f32 to vector<16x128xf32>
    %368 = arith.mulf %367, %285 : vector<16x128xf32>
    %369 = arith.addf %365, %368 : vector<16x128xf32>
    %c15_i32_46 = arith.constant 15 : i32
    %370 = tpu.dynamic_rotate %369 by %c15_i32_46 dim 0 : vector<16x128xf32>, i32 -> vector<16x128xf32>
    %371 = vector.broadcast %15 : vector<16x1xf32> to vector<16x128xf32>
    %372 = arith.mulf %370, %371 : vector<16x128xf32>
    %373 = arith.addf %350, %372 : vector<16x128xf32>
    %c70 = arith.constant 70 : index
    %374 = memref.load %arg1[%c70] : memref<100xf32, #tpu.memory_space<smem>>
    %375 = vector.broadcast %374 : f32 to vector<16x128xf32>
    %376 = arith.mulf %375, %276 : vector<16x128xf32>
    %c71 = arith.constant 71 : index
    %377 = memref.load %arg1[%c71] : memref<100xf32, #tpu.memory_space<smem>>
    %378 = vector.broadcast %377 : f32 to vector<16x128xf32>
    %379 = arith.mulf %378, %279 : vector<16x128xf32>
    %380 = arith.addf %376, %379 : vector<16x128xf32>
    %c72 = arith.constant 72 : index
    %381 = memref.load %arg1[%c72] : memref<100xf32, #tpu.memory_space<smem>>
    %382 = vector.broadcast %381 : f32 to vector<16x128xf32>
    %383 = arith.mulf %382, %273 : vector<16x128xf32>
    %384 = arith.addf %380, %383 : vector<16x128xf32>
    %c73 = arith.constant 73 : index
    %385 = memref.load %arg1[%c73] : memref<100xf32, #tpu.memory_space<smem>>
    %386 = vector.broadcast %385 : f32 to vector<16x128xf32>
    %387 = arith.mulf %386, %282 : vector<16x128xf32>
    %388 = arith.addf %384, %387 : vector<16x128xf32>
    %c74 = arith.constant 74 : index
    %389 = memref.load %arg1[%c74] : memref<100xf32, #tpu.memory_space<smem>>
    %390 = vector.broadcast %389 : f32 to vector<16x128xf32>
    %391 = arith.mulf %390, %285 : vector<16x128xf32>
    %392 = arith.addf %388, %391 : vector<16x128xf32>
    %c14_i32_47 = arith.constant 14 : i32
    %393 = tpu.dynamic_rotate %392 by %c14_i32_47 dim 0 : vector<16x128xf32>, i32 -> vector<16x128xf32>
    %394 = vector.broadcast %17 : vector<16x1xf32> to vector<16x128xf32>
    %395 = arith.mulf %393, %394 : vector<16x128xf32>
    %396 = arith.addf %373, %395 : vector<16x128xf32>
    %c2_48 = arith.constant 2 : index
    %397 = memref.load %arg2[%c2_48] : memref<4xf32, #tpu.memory_space<smem>>
    %398 = vector.broadcast %397 : f32 to vector<16x128xf32>
    %399 = arith.addf %396, %398 : vector<16x128xf32>
    %cst_49 = arith.constant 0.000000e+00 : f32
    %400 = vector.broadcast %cst_49 : f32 to vector<16x128xf32>
    %401 = arith.maximumf %399, %400 : vector<16x128xf32>
    %c2_i32_50 = arith.constant 2 : i32
    %402 = tpu.dynamic_rotate %401 by %c2_i32_50 dim 1 : vector<16x128xf32>, i32 -> vector<16x128xf32>
    %403 = vector.broadcast %3 : vector<1x128xf32> to vector<16x128xf32>
    %404 = arith.mulf %402, %403 : vector<16x128xf32>
    %c1_i32_51 = arith.constant 1 : i32
    %405 = tpu.dynamic_rotate %401 by %c1_i32_51 dim 1 : vector<16x128xf32>, i32 -> vector<16x128xf32>
    %406 = vector.broadcast %5 : vector<1x128xf32> to vector<16x128xf32>
    %407 = arith.mulf %405, %406 : vector<16x128xf32>
    %c127_i32_52 = arith.constant 127 : i32
    %408 = tpu.dynamic_rotate %401 by %c127_i32_52 dim 1 : vector<16x128xf32>, i32 -> vector<16x128xf32>
    %409 = vector.broadcast %7 : vector<1x128xf32> to vector<16x128xf32>
    %410 = arith.mulf %408, %409 : vector<16x128xf32>
    %c126_i32_53 = arith.constant 126 : i32
    %411 = tpu.dynamic_rotate %401 by %c126_i32_53 dim 1 : vector<16x128xf32>, i32 -> vector<16x128xf32>
    %412 = vector.broadcast %9 : vector<1x128xf32> to vector<16x128xf32>
    %413 = arith.mulf %411, %412 : vector<16x128xf32>
    %c75 = arith.constant 75 : index
    %414 = memref.load %arg1[%c75] : memref<100xf32, #tpu.memory_space<smem>>
    %415 = vector.broadcast %414 : f32 to vector<16x128xf32>
    %416 = arith.mulf %415, %404 : vector<16x128xf32>
    %c76 = arith.constant 76 : index
    %417 = memref.load %arg1[%c76] : memref<100xf32, #tpu.memory_space<smem>>
    %418 = vector.broadcast %417 : f32 to vector<16x128xf32>
    %419 = arith.mulf %418, %407 : vector<16x128xf32>
    %420 = arith.addf %416, %419 : vector<16x128xf32>
    %c77 = arith.constant 77 : index
    %421 = memref.load %arg1[%c77] : memref<100xf32, #tpu.memory_space<smem>>
    %422 = vector.broadcast %421 : f32 to vector<16x128xf32>
    %423 = arith.mulf %422, %401 : vector<16x128xf32>
    %424 = arith.addf %420, %423 : vector<16x128xf32>
    %c78 = arith.constant 78 : index
    %425 = memref.load %arg1[%c78] : memref<100xf32, #tpu.memory_space<smem>>
    %426 = vector.broadcast %425 : f32 to vector<16x128xf32>
    %427 = arith.mulf %426, %410 : vector<16x128xf32>
    %428 = arith.addf %424, %427 : vector<16x128xf32>
    %c79 = arith.constant 79 : index
    %429 = memref.load %arg1[%c79] : memref<100xf32, #tpu.memory_space<smem>>
    %430 = vector.broadcast %429 : f32 to vector<16x128xf32>
    %431 = arith.mulf %430, %413 : vector<16x128xf32>
    %432 = arith.addf %428, %431 : vector<16x128xf32>
    %c2_i32_54 = arith.constant 2 : i32
    %433 = tpu.dynamic_rotate %432 by %c2_i32_54 dim 0 : vector<16x128xf32>, i32 -> vector<16x128xf32>
    %434 = vector.broadcast %11 : vector<16x1xf32> to vector<16x128xf32>
    %435 = arith.mulf %433, %434 : vector<16x128xf32>
    %c80 = arith.constant 80 : index
    %436 = memref.load %arg1[%c80] : memref<100xf32, #tpu.memory_space<smem>>
    %437 = vector.broadcast %436 : f32 to vector<16x128xf32>
    %438 = arith.mulf %437, %404 : vector<16x128xf32>
    %c81 = arith.constant 81 : index
    %439 = memref.load %arg1[%c81] : memref<100xf32, #tpu.memory_space<smem>>
    %440 = vector.broadcast %439 : f32 to vector<16x128xf32>
    %441 = arith.mulf %440, %407 : vector<16x128xf32>
    %442 = arith.addf %438, %441 : vector<16x128xf32>
    %c82 = arith.constant 82 : index
    %443 = memref.load %arg1[%c82] : memref<100xf32, #tpu.memory_space<smem>>
    %444 = vector.broadcast %443 : f32 to vector<16x128xf32>
    %445 = arith.mulf %444, %401 : vector<16x128xf32>
    %446 = arith.addf %442, %445 : vector<16x128xf32>
    %c83 = arith.constant 83 : index
    %447 = memref.load %arg1[%c83] : memref<100xf32, #tpu.memory_space<smem>>
    %448 = vector.broadcast %447 : f32 to vector<16x128xf32>
    %449 = arith.mulf %448, %410 : vector<16x128xf32>
    %450 = arith.addf %446, %449 : vector<16x128xf32>
    %c84 = arith.constant 84 : index
    %451 = memref.load %arg1[%c84] : memref<100xf32, #tpu.memory_space<smem>>
    %452 = vector.broadcast %451 : f32 to vector<16x128xf32>
    %453 = arith.mulf %452, %413 : vector<16x128xf32>
    %454 = arith.addf %450, %453 : vector<16x128xf32>
    %c1_i32_55 = arith.constant 1 : i32
    %455 = tpu.dynamic_rotate %454 by %c1_i32_55 dim 0 : vector<16x128xf32>, i32 -> vector<16x128xf32>
    %456 = vector.broadcast %13 : vector<16x1xf32> to vector<16x128xf32>
    %457 = arith.mulf %455, %456 : vector<16x128xf32>
    %458 = arith.addf %435, %457 : vector<16x128xf32>
    %c85 = arith.constant 85 : index
    %459 = memref.load %arg1[%c85] : memref<100xf32, #tpu.memory_space<smem>>
    %460 = vector.broadcast %459 : f32 to vector<16x128xf32>
    %461 = arith.mulf %460, %404 : vector<16x128xf32>
    %c86 = arith.constant 86 : index
    %462 = memref.load %arg1[%c86] : memref<100xf32, #tpu.memory_space<smem>>
    %463 = vector.broadcast %462 : f32 to vector<16x128xf32>
    %464 = arith.mulf %463, %407 : vector<16x128xf32>
    %465 = arith.addf %461, %464 : vector<16x128xf32>
    %c87 = arith.constant 87 : index
    %466 = memref.load %arg1[%c87] : memref<100xf32, #tpu.memory_space<smem>>
    %467 = vector.broadcast %466 : f32 to vector<16x128xf32>
    %468 = arith.mulf %467, %401 : vector<16x128xf32>
    %469 = arith.addf %465, %468 : vector<16x128xf32>
    %c88 = arith.constant 88 : index
    %470 = memref.load %arg1[%c88] : memref<100xf32, #tpu.memory_space<smem>>
    %471 = vector.broadcast %470 : f32 to vector<16x128xf32>
    %472 = arith.mulf %471, %410 : vector<16x128xf32>
    %473 = arith.addf %469, %472 : vector<16x128xf32>
    %c89 = arith.constant 89 : index
    %474 = memref.load %arg1[%c89] : memref<100xf32, #tpu.memory_space<smem>>
    %475 = vector.broadcast %474 : f32 to vector<16x128xf32>
    %476 = arith.mulf %475, %413 : vector<16x128xf32>
    %477 = arith.addf %473, %476 : vector<16x128xf32>
    %478 = arith.addf %458, %477 : vector<16x128xf32>
    %c90 = arith.constant 90 : index
    %479 = memref.load %arg1[%c90] : memref<100xf32, #tpu.memory_space<smem>>
    %480 = vector.broadcast %479 : f32 to vector<16x128xf32>
    %481 = arith.mulf %480, %404 : vector<16x128xf32>
    %c91 = arith.constant 91 : index
    %482 = memref.load %arg1[%c91] : memref<100xf32, #tpu.memory_space<smem>>
    %483 = vector.broadcast %482 : f32 to vector<16x128xf32>
    %484 = arith.mulf %483, %407 : vector<16x128xf32>
    %485 = arith.addf %481, %484 : vector<16x128xf32>
    %c92 = arith.constant 92 : index
    %486 = memref.load %arg1[%c92] : memref<100xf32, #tpu.memory_space<smem>>
    %487 = vector.broadcast %486 : f32 to vector<16x128xf32>
    %488 = arith.mulf %487, %401 : vector<16x128xf32>
    %489 = arith.addf %485, %488 : vector<16x128xf32>
    %c93 = arith.constant 93 : index
    %490 = memref.load %arg1[%c93] : memref<100xf32, #tpu.memory_space<smem>>
    %491 = vector.broadcast %490 : f32 to vector<16x128xf32>
    %492 = arith.mulf %491, %410 : vector<16x128xf32>
    %493 = arith.addf %489, %492 : vector<16x128xf32>
    %c94 = arith.constant 94 : index
    %494 = memref.load %arg1[%c94] : memref<100xf32, #tpu.memory_space<smem>>
    %495 = vector.broadcast %494 : f32 to vector<16x128xf32>
    %496 = arith.mulf %495, %413 : vector<16x128xf32>
    %497 = arith.addf %493, %496 : vector<16x128xf32>
    %c15_i32_56 = arith.constant 15 : i32
    %498 = tpu.dynamic_rotate %497 by %c15_i32_56 dim 0 : vector<16x128xf32>, i32 -> vector<16x128xf32>
    %499 = vector.broadcast %15 : vector<16x1xf32> to vector<16x128xf32>
    %500 = arith.mulf %498, %499 : vector<16x128xf32>
    %501 = arith.addf %478, %500 : vector<16x128xf32>
    %c95 = arith.constant 95 : index
    %502 = memref.load %arg1[%c95] : memref<100xf32, #tpu.memory_space<smem>>
    %503 = vector.broadcast %502 : f32 to vector<16x128xf32>
    %504 = arith.mulf %503, %404 : vector<16x128xf32>
    %c96 = arith.constant 96 : index
    %505 = memref.load %arg1[%c96] : memref<100xf32, #tpu.memory_space<smem>>
    %506 = vector.broadcast %505 : f32 to vector<16x128xf32>
    %507 = arith.mulf %506, %407 : vector<16x128xf32>
    %508 = arith.addf %504, %507 : vector<16x128xf32>
    %c97 = arith.constant 97 : index
    %509 = memref.load %arg1[%c97] : memref<100xf32, #tpu.memory_space<smem>>
    %510 = vector.broadcast %509 : f32 to vector<16x128xf32>
    %511 = arith.mulf %510, %401 : vector<16x128xf32>
    %512 = arith.addf %508, %511 : vector<16x128xf32>
    %c98 = arith.constant 98 : index
    %513 = memref.load %arg1[%c98] : memref<100xf32, #tpu.memory_space<smem>>
    %514 = vector.broadcast %513 : f32 to vector<16x128xf32>
    %515 = arith.mulf %514, %410 : vector<16x128xf32>
    %516 = arith.addf %512, %515 : vector<16x128xf32>
    %c99 = arith.constant 99 : index
    %517 = memref.load %arg1[%c99] : memref<100xf32, #tpu.memory_space<smem>>
    %518 = vector.broadcast %517 : f32 to vector<16x128xf32>
    %519 = arith.mulf %518, %413 : vector<16x128xf32>
    %520 = arith.addf %516, %519 : vector<16x128xf32>
    %c14_i32_57 = arith.constant 14 : i32
    %521 = tpu.dynamic_rotate %520 by %c14_i32_57 dim 0 : vector<16x128xf32>, i32 -> vector<16x128xf32>
    %522 = vector.broadcast %17 : vector<16x1xf32> to vector<16x128xf32>
    %523 = arith.mulf %521, %522 : vector<16x128xf32>
    %524 = arith.addf %501, %523 : vector<16x128xf32>
    %c3_58 = arith.constant 3 : index
    %525 = memref.load %arg2[%c3_58] : memref<4xf32, #tpu.memory_space<smem>>
    %526 = vector.broadcast %525 : f32 to vector<16x128xf32>
    %527 = arith.addf %524, %526 : vector<16x128xf32>
    %cst_59 = arith.constant 0.000000e+00 : f32
    %528 = vector.broadcast %cst_59 : f32 to vector<16x128xf32>
    %529 = arith.maximumf %527, %528 : vector<16x128xf32>
    %c0_60 = arith.constant 0 : index
    %c0_61 = arith.constant 0 : index
    %c0_62 = arith.constant 0 : index
    %530 = vector.load %arg6[%c0_60, %c0_61, %c0_62] : memref<1x16x128xf32, #tpu.memory_space<vmem>>, vector<1x16x128xf32>
    %531 = vector.shape_cast %530 : vector<1x16x128xf32> to vector<16x128xf32>
    %532 = vector.shape_cast %529 : vector<16x128xf32> to vector<1x16x128xf32>
    tpu.vector_store %arg6[%c0_60, %c0_61, %c0_62], %532 {strides = array<i32>} : memref<1x16x128xf32, #tpu.memory_space<vmem>>, vector<1x16x128xf32>,
    return
  }
  func.func @transform_0(%arg0: i32) -> i32 {
    %c0_i32 = arith.constant 0 : i32
    %c0_i32_0 = arith.constant 0 : i32
    return %c0_i32 : i32
  }
  func.func @transform_1(%arg0: i32) -> i32 {
    %c0_i32 = arith.constant 0 : i32
    %c0_i32_0 = arith.constant 0 : i32
    return %c0_i32 : i32
  }
  func.func @transform_2(%arg0: i32) -> (i32, i32, i32) {
    %c0_i32 = arith.constant 0 : i32
    %c0_i32_0 = arith.constant 0 : i32
    %c0_i32_1 = arith.constant 0 : i32
    %c0_i32_2 = arith.constant 0 : i32
    return %c0_i32, %c0_i32_0, %c0_i32_1 : i32, i32, i32
  }
  func.func @transform_3(%arg0: i32) -> (i32, i32, i32) {
    %c0_i32 = arith.constant 0 : i32
    %c0_i32_0 = arith.constant 0 : i32
    %c0_i32_1 = arith.constant 0 : i32
    %c0_i32_2 = arith.constant 0 : i32
    return %c0_i32, %c0_i32_0, %c0_i32_1 : i32, i32, i32
  }
  func.func @transform_4(%arg0: i32) -> (i32, i32, i32) {
    %c0_i32 = arith.constant 0 : i32
    %c0_i32_0 = arith.constant 0 : i32
    %c0_i32_1 = arith.constant 0 : i32
    return %arg0, %c0_i32, %c0_i32_0 : i32, i32, i32
  }
  func.func @transform_5(%arg0: i32) -> (i32, i32, i32) {
    %c0_i32 = arith.constant 0 : i32
    %c0_i32_0 = arith.constant 0 : i32
    %c0_i32_1 = arith.constant 0 : i32
    return %arg0, %c0_i32, %c0_i32_0 : i32, i32, i32
  }
}

</mosaic_0001>

<llo_original>
// kernel: tpu_custom_call.1
$region0: #{tpu_custom_call.1}
  #allocation0 [shape = 'u32[]', space=smem, size = 0x4, offset = 0x4, fixed_abs, tag = 'smem constant byte address 0x4 - core index']
  #allocation1 [shape = 'u32[144,128]{1,0:T(1,128)}', space=vmem, size = 0x12000, scoped, tag = 'internal scratch']
  %s0 = inlined_call_operand.vmem [shape: f32[100], index: 0, kind: input, shape index: {}]
  %s1 = inlined_call_operand.vmem [shape: f32[4], index: 1, kind: input, shape index: {}]
  %s2 = inlined_call_operand.vmem [shape: f32[4,1,128], index: 2, kind: input, shape index: {}]
  %s3 = inlined_call_operand.vmem [shape: f32[4,16,1], index: 3, kind: input, shape index: {}]
  %s4 = inlined_call_operand.vmem [shape: f32[1,16,128], index: 4, kind: input, shape index: {}]
  %s5 = inlined_call_operand.hbm [shape: f32[1,16,128], index: 5, kind: output, shape index: {}]
  %s6 = sld [smem:[#allocation0]]
  $region38: #{tpu_custom_call.1} parent=0
    _
  %s8 = ssub.s32 1, %s6
  %s9 = scalar_select 0, %s8, %s6
  $region1: #{tpu_custom_call.1} parent=0
    #allocation2 [shape = 'u8[512]{0}', space=smem, size = 0x200, scoped, tag = 'input window, operand 0, single buffered']
    #allocation3 [shape = 's32[1]{0}', space=sflag, size = 0x4, scoped, tag = 'scoped memory for tpu_custom_call.1']
    #allocation4 [shape = 's32[1]{0}', space=sflag, size = 0x4, scoped, tag = 'scoped memory for tpu_custom_call.1']
    #allocation5 [shape = 'u8[512]{0}', space=smem, size = 0x200, scoped, tag = 'input window, operand 1, single buffered']
    #allocation6 [shape = 's32[1]{0}', space=sflag, size = 0x4, scoped, tag = 'scoped memory for tpu_custom_call.1']
    #allocation7 [shape = 'u8[8192]{0}', space=vmem, size = 0x2000, scoped, tag = 'output window, operand 0, single buffered']
    %10 = vsyncpa [#allocation4], 0
    %11 = vsyncpa [#allocation6], 0
    %12 = vsyncpa [#allocation3], 0
    // Predicated region
    $region2: #{tpu_custom_call.1} parent=1 // pred_check
      _
    $region3: #{tpu_custom_call.1} parent=1 // pred_check_branch
      %14 = sbr.rel (0) target = $region5
    $region4: #{tpu_custom_call.1} parent=1 // pred_region
      %s16 = ssub.s32 16, 16
      %17 = vsyncadd [#allocation4], %s16
      %s19 = sshll.u32 %s0, 4
      %s20 = int_to_ptr.vmem [resolvable:$true] %s19
      %22 = dma.vmem_to_smem %s20, 16, [#allocation2], [#allocation4]
    $region5: #{tpu_custom_call.1} parent=1 // pred_fallthru
      _
    // Predicated region
    $region6: #{tpu_custom_call.1} parent=1 // pred_check
      _
    $region7: #{tpu_custom_call.1} parent=1 // pred_check_branch
      %24 = sbr.rel (0) target = $region9
    $region8: #{tpu_custom_call.1} parent=1 // pred_region
      %s26 = ssub.s32 16, 16
      %27 = vsyncadd [#allocation6], %s26
      %s29 = sshll.u32 %s1, 4
      %s30 = int_to_ptr.vmem [resolvable:$true] %s29
      %32 = dma.vmem_to_smem %s30, 16, [#allocation5], [#allocation6]
    $region9: #{tpu_custom_call.1} parent=1 // pred_fallthru
      _
    // Predicated region
    $region10: #{tpu_custom_call.1} parent=1 // pred_check
      _
    $region11: #{tpu_custom_call.1} parent=1 // pred_check_branch
      %34 = sbr.rel (0) target = $region13
    $region12: #{tpu_custom_call.1} parent=1 // pred_region
      _
    $region13: #{tpu_custom_call.1} parent=1 // pred_fallthru
      _
    // Predicated region
    $region14: #{tpu_custom_call.1} parent=1 // pred_check
      _
    $region15: #{tpu_custom_call.1} parent=1 // pred_check_branch
      %36 = sbr.rel (0) target = $region17
    $region16: #{tpu_custom_call.1} parent=1 // pred_region
      _
    $region17: #{tpu_custom_call.1} parent=1 // pred_fallthru
      _
    // Predicated region
    $region18: #{tpu_custom_call.1} parent=1 // pred_check
      _
    $region19: #{tpu_custom_call.1} parent=1 // pred_check_branch
      %38 = sbr.rel (0) target = $region21
    $region20: #{tpu_custom_call.1} parent=1 // pred_region
      _
    $region21: #{tpu_custom_call.1} parent=1 // pred_fallthru
      _
    // Predicated region
    $region22: #{tpu_custom_call.1} parent=1 // pred_check
      _
    $region23: #{tpu_custom_call.1} parent=1 // pred_check_branch
      %40 = sbr.rel (0) target = $region25
    $region24: #{tpu_custom_call.1} parent=1 // pred_region
      %41 = dma.done [#allocation4], 16
    $region25: #{tpu_custom_call.1} parent=1 // pred_fallthru
      _
    // Predicated region
    $region26: #{tpu_custom_call.1} parent=1 // pred_check
      _
    $region27: #{tpu_custom_call.1} parent=1 // pred_check_branch
      %43 = sbr.rel (0) target = $region29
    $region28: #{tpu_custom_call.1} parent=1 // pred_region
      %44 = dma.done [#allocation6], 16
    $region29: #{tpu_custom_call.1} parent=1 // pred_fallthru
      _
    %45 = sfence
    %v46 = vld [vmem:[%s4] sm:$0xff]
    %v47 = vld [vmem:[%s4 + $0x8] sm:$0xff]
    %v48 = vld [vmem:[%s2] sm:$0x1]
    %s49 = scalar_lea.vmem %s2, 1
    %v50 = vld [vmem:[%s49] sm:$0x1]
    %s51 = scalar_lea.vmem %s2, 2
    %v52 = vld [vmem:[%s51] sm:$0x1]
    %s53 = scalar_lea.vmem %s2, 3
    %v54 = vld [vmem:[%s53] sm:$0x1]
    %v55 = vld [vmem:[%s3] sm:$0xff]
    %v56 = vld [vmem:[%s3 + $0x8] sm:$0xff]
    %s57 = scalar_lea.vmem %s3, 16
    %v58 = vld [vmem:[%s57] sm:$0xff]
    %v59 = vld [vmem:[%s57 + $0x8] sm:$0xff]
    %s60 = scalar_lea.vmem %s3, 32
    %v61 = vld [vmem:[%s60] sm:$0xff]
    %v62 = vld [vmem:[%s60 + $0x8] sm:$0xff]
    %s63 = scalar_lea.vmem %s3, 48
    %v64 = vld [vmem:[%s63] sm:$0xff]
    %v65 = vld [vmem:[%s63 + $0x8] sm:$0xff]
    %66 = vrot.lane.b32.xlu0 %v46, 2
    %v67 = vpop.permute.xlu0 %66
    %68 = vrot.lane.b32.xlu0 %v47, 2
    %v69 = vpop.permute.xlu0 %68
    %v71 = vlaneseq
    %v72 = vshrl.u32 %v71, 7
    %v73 = vsub.s32 0, %v72
    %v74 = vrot.slane %v48, %v73
    %v76 = vmul.f32 %v67, %v74
    %v77 = vmul.f32 %v69, %v74
    %78 = vrot.lane.b32.xlu0 %v46, 1
    %v79 = vpop.permute.xlu0 %78
    %80 = vrot.lane.b32.xlu0 %v47, 1
    %v81 = vpop.permute.xlu0 %80
    %v83 = vlaneseq
    %v84 = vshrl.u32 %v83, 7
    %v85 = vsub.s32 0, %v84
    %v86 = vrot.slane %v50, %v85
    %v88 = vmul.f32 %v79, %v86
    %v89 = vmul.f32 %v81, %v86
    %90 = vrot.lane.b32.xlu0 %v46, 127
    %v91 = vpop.permute.xlu0 %90
    %92 = vrot.lane.b32.xlu0 %v47, 127
    %v93 = vpop.permute.xlu0 %92
    %v95 = vlaneseq
    %v96 = vshrl.u32 %v95, 7
    %v97 = vsub.s32 0, %v96
    %v98 = vrot.slane %v52, %v97
    %v100 = vmul.f32 %v91, %v98
    %v101 = vmul.f32 %v93, %v98
    %102 = vrot.lane.b32.xlu0 %v46, 126
    %v103 = vpop.permute.xlu0 %102
    %104 = vrot.lane.b32.xlu0 %v47, 126
    %v105 = vpop.permute.xlu0 %104
    %v107 = vlaneseq
    %v108 = vshrl.u32 %v107, 7
    %v109 = vsub.s32 0, %v108
    %v110 = vrot.slane %v54, %v109
    %v112 = vmul.f32 %v103, %v110
    %v113 = vmul.f32 %v105, %v110
    %s114 = sld [smem:[#allocation2]]
    %v115 = vstv %s114
    %v116 = vmul.f32 %v115, %v76
    %v117 = vmul.f32 %v115, %v77
    %s118 = sld [smem:[#allocation2 + $0x1]]
    %v119 = vstv %s118
    %v120 = vmul.f32 %v119, %v88
    %v121 = vmul.f32 %v119, %v89
    %v122 = vadd.f32 %v116, %v120
    %v123 = vadd.f32 %v117, %v121
    %s124 = sld [smem:[#allocation2 + $0x2]]
    %v125 = vstv %s124
    %v126 = vmul.f32 %v125, %v46
    %v127 = vmul.f32 %v125, %v47
    %v128 = vadd.f32 %v122, %v126
    %v129 = vadd.f32 %v123, %v127
    %s130 = sld [smem:[#allocation2 + $0x3]]
    %v131 = vstv %s130
    %v132 = vmul.f32 %v131, %v100
    %v133 = vmul.f32 %v131, %v101
    %v134 = vadd.f32 %v128, %v132
    %v135 = vadd.f32 %v129, %v133
    %s136 = sld [smem:[#allocation2 + $0x4]]
    %v137 = vstv %s136
    %v138 = vmul.f32 %v137, %v112
    %v139 = vmul.f32 %v137, %v113
    %v140 = vadd.f32 %v134, %v138
    %v141 = vadd.f32 %v135, %v139
    %v142 = vrot.slane %v140, 6
    %v143 = vrot.slane %v141, 6
    %v144 = vlaneseq
    %v145 = vshrl.u32 %v144, 7
    %vm146 = vcmp.lt.s32.totalorder %v145, 2
    %v147 = vsel %vm146, %v142, %v143
    %v148 = vsel %vm146, %v143, %v142
    %150 = vset.pattern.permute.xlu0 0
    %151 = vperm.xlu0 %150, %v55
    %v152 = vpop.permute.xlu0 %151
    %155 = vset.pattern.permute.xlu0 0
    %156 = vperm.xlu0 %155, %v56
    %v157 = vpop.permute.xlu0 %156
    %v159 = vmul.f32 %v148, %v152
    %v160 = vmul.f32 %v147, %v157
    %s161 = sld [smem:[#allocation2 + $0x5]]
    %v162 = vstv %s161
    %v163 = vmul.f32 %v162, %v76
    %v164 = vmul.f32 %v162, %v77
    %s165 = sld [smem:[#allocation2 + $0x6]]
    %v166 = vstv %s165
    %v167 = vmul.f32 %v166, %v88
    %v168 = vmul.f32 %v166, %v89
    %v169 = vadd.f32 %v163, %v167
    %v170 = vadd.f32 %v164, %v168
    %s171 = sld [smem:[#allocation2 + $0x7]]
    %v172 = vstv %s171
    %v173 = vmul.f32 %v172, %v46
    %v174 = vmul.f32 %v172, %v47
    %v175 = vadd.f32 %v169, %v173
    %v176 = vadd.f32 %v170, %v174
    %s177 = sld [smem:[#allocation2 + $0x8]]
    %v178 = vstv %s177
    %v179 = vmul.f32 %v178, %v100
    %v180 = vmul.f32 %v178, %v101
    %v181 = vadd.f32 %v175, %v179
    %v182 = vadd.f32 %v176, %v180
    %s183 = sld [smem:[#allocation2 + $0x9]]
    %v184 = vstv %s183
    %v185 = vmul.f32 %v184, %v112
    %v186 = vmul.f32 %v184, %v113
    %v187 = vadd.f32 %v181, %v185
    %v188 = vadd.f32 %v182, %v186
    %v189 = vrot.slane %v187, 7
    %v190 = vrot.slane %v188, 7
    %vm191 = vcmp.lt.s32.totalorder %v145, 1
    %v192 = vsel %vm191, %v189, %v190
    %v193 = vsel %vm191, %v190, %v189
    %195 = vset.pattern.permute.xlu0 0
    %196 = vperm.xlu0 %195, %v58
    %v197 = vpop.permute.xlu0 %196
    %200 = vset.pattern.permute.xlu0 0
    %201 = vperm.xlu0 %200, %v59
    %v202 = vpop.permute.xlu0 %201
    %v204 = vmul.f32 %v193, %v197
    %v205 = vmul.f32 %v192, %v202
    %v206 = vadd.f32 %v159, %v204
    %v207 = vadd.f32 %v160, %v205
    %s208 = sld [smem:[#allocation2 + $0xa]]
    %v209 = vstv %s208
    %v210 = vmul.f32 %v209, %v76
    %v211 = vmul.f32 %v209, %v77
    %s212 = sld [smem:[#allocation2 + $0xb]]
    %v213 = vstv %s212
    %v214 = vmul.f32 %v213, %v88
    %v215 = vmul.f32 %v213, %v89
    %v216 = vadd.f32 %v210, %v214
    %v217 = vadd.f32 %v211, %v215
    %s218 = sld [smem:[#allocation2 + $0xc]]
    %v219 = vstv %s218
    %v220 = vmul.f32 %v219, %v46
    %v221 = vmul.f32 %v219, %v47
    %v222 = vadd.f32 %v216, %v220
    %v223 = vadd.f32 %v217, %v221
    %s224 = sld [smem:[#allocation2 + $0xd]]
    %v225 = vstv %s224
    %v226 = vmul.f32 %v225, %v100
    %v227 = vmul.f32 %v225, %v101
    %v228 = vadd.f32 %v222, %v226
    %v229 = vadd.f32 %v223, %v227
    %s230 = sld [smem:[#allocation2 + $0xe]]
    %v231 = vstv %s230
    %v232 = vmul.f32 %v231, %v112
    %v233 = vmul.f32 %v231, %v113
    %v234 = vadd.f32 %v228, %v232
    %v235 = vadd.f32 %v229, %v233
    %v236 = vadd.f32 %v206, %v234
    %v237 = vadd.f32 %v207, %v235
    %s238 = sld [smem:[#allocation2 + $0xf]]
    %v239 = vstv %s238
    %v240 = vmul.f32 %v239, %v76
    %v241 = vmul.f32 %v239, %v77
    %s242 = sld [smem:[#allocation2 + $0x10]]
    %v243 = vstv %s242
    %v244 = vmul.f32 %v243, %v88
    %v245 = vmul.f32 %v243, %v89
    %v246 = vadd.f32 %v240, %v244
    %v247 = vadd.f32 %v241, %v245
    %s248 = sld [smem:[#allocation2 + $0x11]]
    %v249 = vstv %s248
    %v250 = vmul.f32 %v249, %v46
    %v251 = vmul.f32 %v249, %v47
    %v252 = vadd.f32 %v246, %v250
    %v253 = vadd.f32 %v247, %v251
    %s254 = sld [smem:[#allocation2 + $0x12]]
    %v255 = vstv %s254
    %v256 = vmul.f32 %v255, %v100
    %v257 = vmul.f32 %v255, %v101
    %v258 = vadd.f32 %v252, %v256
    %v259 = vadd.f32 %v253, %v257
    %s260 = sld [smem:[#allocation2 + $0x13]]
    %v261 = vstv %s260
    %v262 = vmul.f32 %v261, %v112
    %v263 = vmul.f32 %v261, %v113
    %v264 = vadd.f32 %v258, %v262
    %v265 = vadd.f32 %v259, %v263
    %v266 = vrot.slane %v264, 1
    %v267 = vrot.slane %v265, 1
    %vm268 = vcmp.lt.s32.totalorder %v145, 7
    %v269 = vsel %vm268, %v266, %v267
    %v270 = vsel %vm268, %v267, %v266
    %272 = vset.pattern.permute.xlu0 0
    %273 = vperm.xlu0 %272, %v61
    %v274 = vpop.permute.xlu0 %273
    %277 = vset.pattern.permute.xlu0 0
    %278 = vperm.xlu0 %277, %v62
    %v279 = vpop.permute.xlu0 %278
    %v281 = vmul.f32 %v269, %v274
    %v282 = vmul.f32 %v270, %v279
    %v283 = vadd.f32 %v236, %v281
    %v284 = vadd.f32 %v237, %v282
    %s285 = sld [smem:[#allocation2 + $0x14]]
    %v286 = vstv %s285
    %v287 = vmul.f32 %v286, %v76
    %v288 = vmul.f32 %v286, %v77
    %s289 = sld [smem:[#allocation2 + $0x15]]
    %v290 = vstv %s289
    %v291 = vmul.f32 %v290, %v88
    %v292 = vmul.f32 %v290, %v89
    %v293 = vadd.f32 %v287, %v291
    %v294 = vadd.f32 %v288, %v292
    %s295 = sld [smem:[#allocation2 + $0x16]]
    %v296 = vstv %s295
    %v297 = vmul.f32 %v296, %v46
    %v298 = vmul.f32 %v296, %v47
    %v299 = vadd.f32 %v293, %v297
    %v300 = vadd.f32 %v294, %v298
    %s301 = sld [smem:[#allocation2 + $0x17]]
    %v302 = vstv %s301
    %v303 = vmul.f32 %v302, %v100
    %v304 = vmul.f32 %v302, %v101
    %v305 = vadd.f32 %v299, %v303
    %v306 = vadd.f32 %v300, %v304
    %s307 = sld [smem:[#allocation2 + $0x18]]
    %v308 = vstv %s307
    %v309 = vmul.f32 %v308, %v112
    %v310 = vmul.f32 %v308, %v113
    %v311 = vadd.f32 %v305, %v309
    %v312 = vadd.f32 %v306, %v310
    %v313 = vrot.slane %v311, 2
    %v314 = vrot.slane %v312, 2
    %vm315 = vcmp.lt.s32.totalorder %v145, 6
    %v316 = vsel %vm315, %v313, %v314
    %v317 = vsel %vm315, %v314, %v313
    %319 = vset.pattern.permute.xlu0 0
    %320 = vperm.xlu0 %319, %v64
    %v321 = vpop.permute.xlu0 %320
    %324 = vset.pattern.permute.xlu0 0
    %325 = vperm.xlu0 %324, %v65
    %v326 = vpop.permute.xlu0 %325
    %v328 = vmul.f32 %v316, %v321
    %v329 = vmul.f32 %v317, %v326
    %v330 = vadd.f32 %v283, %v328
    %v331 = vadd.f32 %v284, %v329
    %s332 = sld [smem:[#allocation5]]
    %v333 = vstv %s332
    %v334 = vadd.f32 %v330, %v333
    %v335 = vadd.f32 %v331, %v333
    %v336 = vmax.f32 %v334, 0.0
    %v337 = vmax.f32 %v335, 0.0
    %338 = vrot.lane.b32.xlu0 %v336, 2
    %v339 = vpop.permute.xlu0 %338
    %340 = vrot.lane.b32.xlu0 %v337, 2
    %v341 = vpop.permute.xlu0 %340
    %v342 = vmul.f32 %v339, %v74
    %v343 = vmul.f32 %v341, %v74
    %344 = vrot.lane.b32.xlu0 %v336, 1
    %v345 = vpop.permute.xlu0 %344
    %346 = vrot.lane.b32.xlu0 %v337, 1
    %v347 = vpop.permute.xlu0 %346
    %v348 = vmul.f32 %v345, %v86
    %v349 = vmul.f32 %v347, %v86
    %350 = vrot.lane.b32.xlu0 %v336, 127
    %v351 = vpop.permute.xlu0 %350
    %352 = vrot.lane.b32.xlu0 %v337, 127
    %v353 = vpop.permute.xlu0 %352
    %v354 = vmul.f32 %v351, %v98
    %v355 = vmul.f32 %v353, %v98
    %356 = vrot.lane.b32.xlu0 %v336, 126
    %v357 = vpop.permute.xlu0 %356
    %358 = vrot.lane.b32.xlu0 %v337, 126
    %v359 = vpop.permute.xlu0 %358
    %v360 = vmul.f32 %v357, %v110
    %v361 = vmul.f32 %v359, %v110
    %s362 = sld [smem:[#allocation2 + $0x19]]
    %v363 = vstv %s362
    %v364 = vmul.f32 %v363, %v342
    %v365 = vmul.f32 %v363, %v343
    %s366 = sld [smem:[#allocation2 + $0x1a]]
    %v367 = vstv %s366
    %v368 = vmul.f32 %v367, %v348
    %v369 = vmul.f32 %v367, %v349
    %v370 = vadd.f32 %v364, %v368
    %v371 = vadd.f32 %v365, %v369
    %s372 = sld [smem:[#allocation2 + $0x1b]]
    %v373 = vstv %s372
    %v374 = vmul.f32 %v373, %v336
    %v375 = vmul.f32 %v373, %v337
    %v376 = vadd.f32 %v370, %v374
    %v377 = vadd.f32 %v371, %v375
    %s378 = sld [smem:[#allocation2 + $0x1c]]
    %v379 = vstv %s378
    %v380 = vmul.f32 %v379, %v354
    %v381 = vmul.f32 %v379, %v355
    %v382 = vadd.f32 %v376, %v380
    %v383 = vadd.f32 %v377, %v381
    %s384 = sld [smem:[#allocation2 + $0x1d]]
    %v385 = vstv %s384
    %v386 = vmul.f32 %v385, %v360
    %v387 = vmul.f32 %v385, %v361
    %v388 = vadd.f32 %v382, %v386
    %v389 = vadd.f32 %v383, %v387
    %v390 = vrot.slane %v388, 6
    %v391 = vrot.slane %v389, 6
    %v392 = vsel %vm146, %v390, %v391
    %v393 = vsel %vm146, %v391, %v390
    %v394 = vmul.f32 %v393, %v152
    %v395 = vmul.f32 %v392, %v157
    %s396 = sld [smem:[#allocation2 + $0x1e]]
    %v397 = vstv %s396
    %v398 = vmul.f32 %v397, %v342
    %v399 = vmul.f32 %v397, %v343
    %s400 = sld [smem:[#allocation2 + $0x1f]]
    %v401 = vstv %s400
    %v402 = vmul.f32 %v401, %v348
    %v403 = vmul.f32 %v401, %v349
    %v404 = vadd.f32 %v398, %v402
    %v405 = vadd.f32 %v399, %v403
    %s406 = sld [smem:[#allocation2 + $0x20]]
    %v407 = vstv %s406
    %v408 = vmul.f32 %v407, %v336
    %v409 = vmul.f32 %v407, %v337
    %v410 = vadd.f32 %v404, %v408
    %v411 = vadd.f32 %v405, %v409
    %s412 = sld [smem:[#allocation2 + $0x21]]
    %v413 = vstv %s412
    %v414 = vmul.f32 %v413, %v354
    %v415 = vmul.f32 %v413, %v355
    %v416 = vadd.f32 %v410, %v414
    %v417 = vadd.f32 %v411, %v415
    %s418 = sld [smem:[#allocation2 + $0x22]]
    %v419 = vstv %s418
    %v420 = vmul.f32 %v419, %v360
    %v421 = vmul.f32 %v419, %v361
    %v422 = vadd.f32 %v416, %v420
    %v423 = vadd.f32 %v417, %v421
    %v424 = vrot.slane %v422, 7
    %v425 = vrot.slane %v423, 7
    %v426 = vsel %vm191, %v424, %v425
    %v427 = vsel %vm191, %v425, %v424
    %v428 = vmul.f32 %v427, %v197
    %v429 = vmul.f32 %v426, %v202
    %v430 = vadd.f32 %v394, %v428
    %v431 = vadd.f32 %v395, %v429
    %s432 = sld [smem:[#allocation2 + $0x23]]
    %v433 = vstv %s432
    %v434 = vmul.f32 %v433, %v342
    %v435 = vmul.f32 %v433, %v343
    %s436 = sld [smem:[#allocation2 + $0x24]]
    %v437 = vstv %s436
    %v438 = vmul.f32 %v437, %v348
    %v439 = vmul.f32 %v437, %v349
    %v440 = vadd.f32 %v434, %v438
    %v441 = vadd.f32 %v435, %v439
    %s442 = sld [smem:[#allocation2 + $0x25]]
    %v443 = vstv %s442
    %v444 = vmul.f32 %v443, %v336
    %v445 = vmul.f32 %v443, %v337
    %v446 = vadd.f32 %v440, %v444
    %v447 = vadd.f32 %v441, %v445
    %s448 = sld [smem:[#allocation2 + $0x26]]
    %v449 = vstv %s448
    %v450 = vmul.f32 %v449, %v354
    %v451 = vmul.f32 %v449, %v355
    %v452 = vadd.f32 %v446, %v450
    %v453 = vadd.f32 %v447, %v451
    %s454 = sld [smem:[#allocation2 + $0x27]]
    %v455 = vstv %s454
    %v456 = vmul.f32 %v455, %v360
    %v457 = vmul.f32 %v455, %v361
    %v458 = vadd.f32 %v452, %v456
    %v459 = vadd.f32 %v453, %v457
    %v460 = vadd.f32 %v430, %v458
    %v461 = vadd.f32 %v431, %v459
    %s462 = sld [smem:[#allocation2 + $0x28]]
    %v463 = vstv %s462
    %v464 = vmul.f32 %v463, %v342
    %v465 = vmul.f32 %v463, %v343
    %s466 = sld [smem:[#allocation2 + $0x29]]
    %v467 = vstv %s466
    %v468 = vmul.f32 %v467, %v348
    %v469 = vmul.f32 %v467, %v349
    %v470 = vadd.f32 %v464, %v468
    %v471 = vadd.f32 %v465, %v469
    %s472 = sld [smem:[#allocation2 + $0x2a]]
    %v473 = vstv %s472
    %v474 = vmul.f32 %v473, %v336
    %v475 = vmul.f32 %v473, %v337
    %v476 = vadd.f32 %v470, %v474
    %v477 = vadd.f32 %v471, %v475
    %s478 = sld [smem:[#allocation2 + $0x2b]]
    %v479 = vstv %s478
    %v480 = vmul.f32 %v479, %v354
    %v481 = vmul.f32 %v479, %v355
    %v482 = vadd.f32 %v476, %v480
    %v483 = vadd.f32 %v477, %v481
    %s484 = sld [smem:[#allocation2 + $0x2c]]
    %v485 = vstv %s484
    %v486 = vmul.f32 %v485, %v360
    %v487 = vmul.f32 %v485, %v361
    %v488 = vadd.f32 %v482, %v486
    %v489 = vadd.f32 %v483, %v487
    %v490 = vrot.slane %v488, 1
    %v491 = vrot.slane %v489, 1
    %v492 = vsel %vm268, %v490, %v491
    %v493 = vsel %vm268, %v491, %v490
    %v494 = vmul.f32 %v492, %v274
    %v495 = vmul.f32 %v493, %v279
    %v496 = vadd.f32 %v460, %v494
    %v497 = vadd.f32 %v461, %v495
    %s498 = sld [smem:[#allocation2 + $0x2d]]
    %v499 = vstv %s498
    %v500 = vmul.f32 %v499, %v342
    %v501 = vmul.f32 %v499, %v343
    %s502 = sld [smem:[#allocation2 + $0x2e]]
    %v503 = vstv %s502
    %v504 = vmul.f32 %v503, %v348
    %v505 = vmul.f32 %v503, %v349
    %v506 = vadd.f32 %v500, %v504
    %v507 = vadd.f32 %v501, %v505
    %s508 = sld [smem:[#allocation2 + $0x2f]]
    %v509 = vstv %s508
    %v510 = vmul.f32 %v509, %v336
    %v511 = vmul.f32 %v509, %v337
    %v512 = vadd.f32 %v506, %v510
    %v513 = vadd.f32 %v507, %v511
    %s514 = sld [smem:[#allocation2 + $0x30]]
    %v515 = vstv %s514
    %v516 = vmul.f32 %v515, %v354
    %v517 = vmul.f32 %v515, %v355
    %v518 = vadd.f32 %v512, %v516
    %v519 = vadd.f32 %v513, %v517
    %s520 = sld [smem:[#allocation2 + $0x31]]
    %v521 = vstv %s520
    %v522 = vmul.f32 %v521, %v360
    %v523 = vmul.f32 %v521, %v361
    %v524 = vadd.f32 %v518, %v522
    %v525 = vadd.f32 %v519, %v523
    %v526 = vrot.slane %v524, 2
    %v527 = vrot.slane %v525, 2
    %v528 = vsel %vm315, %v526, %v527
    %v529 = vsel %vm315, %v527, %v526
    %v530 = vmul.f32 %v528, %v321
    %v531 = vmul.f32 %v529, %v326
    %v532 = vadd.f32 %v496, %v530
    %v533 = vadd.f32 %v497, %v531
    %s534 = sld [smem:[#allocation5 + $0x1]]
    %v535 = vstv %s534
    %v536 = vadd.f32 %v532, %v535
    %v537 = vadd.f32 %v533, %v535
    %v538 = vmax.f32 %v536, 0.0
    %v539 = vmax.f32 %v537, 0.0
    %540 = vrot.lane.b32.xlu0 %v538, 2
    %v541 = vpop.permute.xlu0 %540
    %542 = vrot.lane.b32.xlu0 %v539, 2
    %v543 = vpop.permute.xlu0 %542
    %v544 = vmul.f32 %v541, %v74
    %v545 = vmul.f32 %v543, %v74
    %546 = vrot.lane.b32.xlu0 %v538, 1
    %v547 = vpop.permute.xlu0 %546
    %548 = vrot.lane.b32.xlu0 %v539, 1
    %v549 = vpop.permute.xlu0 %548
    %v550 = vmul.f32 %v547, %v86
    %v551 = vmul.f32 %v549, %v86
    %552 = vrot.lane.b32.xlu0 %v538, 127
    %v553 = vpop.permute.xlu0 %552
    %554 = vrot.lane.b32.xlu0 %v539, 127
    %v555 = vpop.permute.xlu0 %554
    %v556 = vmul.f32 %v553, %v98
    %v557 = vmul.f32 %v555, %v98
    %558 = vrot.lane.b32.xlu0 %v538, 126
    %v559 = vpop.permute.xlu0 %558
    %560 = vrot.lane.b32.xlu0 %v539, 126
    %v561 = vpop.permute.xlu0 %560
    %v562 = vmul.f32 %v559, %v110
    %v563 = vmul.f32 %v561, %v110
    %s564 = sld [smem:[#allocation2 + $0x32]]
    %v565 = vstv %s564
    %v566 = vmul.f32 %v565, %v544
    %v567 = vmul.f32 %v565, %v545
    %s568 = sld [smem:[#allocation2 + $0x33]]
    %v569 = vstv %s568
    %v570 = vmul.f32 %v569, %v550
    %v571 = vmul.f32 %v569, %v551
    %v572 = vadd.f32 %v566, %v570
    %v573 = vadd.f32 %v567, %v571
    %s574 = sld [smem:[#allocation2 + $0x34]]
    %v575 = vstv %s574
    %v576 = vmul.f32 %v575, %v538
    %v577 = vmul.f32 %v575, %v539
    %v578 = vadd.f32 %v572, %v576
    %v579 = vadd.f32 %v573, %v577
    %s580 = sld [smem:[#allocation2 + $0x35]]
    %v581 = vstv %s580
    %v582 = vmul.f32 %v581, %v556
    %v583 = vmul.f32 %v581, %v557
    %v584 = vadd.f32 %v578, %v582
    %v585 = vadd.f32 %v579, %v583
    %s586 = sld [smem:[#allocation2 + $0x36]]
    %v587 = vstv %s586
    %v588 = vmul.f32 %v587, %v562
    %v589 = vmul.f32 %v587, %v563
    %v590 = vadd.f32 %v584, %v588
    %v591 = vadd.f32 %v585, %v589
    %v592 = vrot.slane %v590, 6
    %v593 = vrot.slane %v591, 6
    %v594 = vsel %vm146, %v592, %v593
    %v595 = vsel %vm146, %v593, %v592
    %v596 = vmul.f32 %v595, %v152
    %v597 = vmul.f32 %v594, %v157
    %s598 = sld [smem:[#allocation2 + $0x37]]
    %v599 = vstv %s598
    %v600 = vmul.f32 %v599, %v544
    %v601 = vmul.f32 %v599, %v545
    %s602 = sld [smem:[#allocation2 + $0x38]]
    %v603 = vstv %s602
    %v604 = vmul.f32 %v603, %v550
    %v605 = vmul.f32 %v603, %v551
    %v606 = vadd.f32 %v600, %v604
    %v607 = vadd.f32 %v601, %v605
    %s608 = sld [smem:[#allocation2 + $0x39]]
    %v609 = vstv %s608
    %v610 = vmul.f32 %v609, %v538
    %v611 = vmul.f32 %v609, %v539
    %v612 = vadd.f32 %v606, %v610
    %v613 = vadd.f32 %v607, %v611
    %s614 = sld [smem:[#allocation2 + $0x3a]]
    %v615 = vstv %s614
    %v616 = vmul.f32 %v615, %v556
    %v617 = vmul.f32 %v615, %v557
    %v618 = vadd.f32 %v612, %v616
    %v619 = vadd.f32 %v613, %v617
    %s620 = sld [smem:[#allocation2 + $0x3b]]
    %v621 = vstv %s620
    %v622 = vmul.f32 %v621, %v562
    %v623 = vmul.f32 %v621, %v563
    %v624 = vadd.f32 %v618, %v622
    %v625 = vadd.f32 %v619, %v623
    %v626 = vrot.slane %v624, 7
    %v627 = vrot.slane %v625, 7
    %v628 = vsel %vm191, %v626, %v627
    %v629 = vsel %vm191, %v627, %v626
    %v630 = vmul.f32 %v629, %v197
    %v631 = vmul.f32 %v628, %v202
    %v632 = vadd.f32 %v596, %v630
    %v633 = vadd.f32 %v597, %v631
    %s634 = sld [smem:[#allocation2 + $0x3c]]
    %v635 = vstv %s634
    %v636 = vmul.f32 %v635, %v544
    %v637 = vmul.f32 %v635, %v545
    %s638 = sld [smem:[#allocation2 + $0x3d]]
    %v639 = vstv %s638
    %v640 = vmul.f32 %v639, %v550
    %v641 = vmul.f32 %v639, %v551
    %v642 = vadd.f32 %v636, %v640
    %v643 = vadd.f32 %v637, %v641
    %s644 = sld [smem:[#allocation2 + $0x3e]]
    %v645 = vstv %s644
    %v646 = vmul.f32 %v645, %v538
    %v647 = vmul.f32 %v645, %v539
    %v648 = vadd.f32 %v642, %v646
    %v649 = vadd.f32 %v643, %v647
    %s650 = sld [smem:[#allocation2 + $0x3f]]
    %v651 = vstv %s650
    %v652 = vmul.f32 %v651, %v556
    %v653 = vmul.f32 %v651, %v557
    %v654 = vadd.f32 %v648, %v652
    %v655 = vadd.f32 %v649, %v653
    %s656 = sld [smem:[#allocation2 + $0x40]]
    %v657 = vstv %s656
    %v658 = vmul.f32 %v657, %v562
    %v659 = vmul.f32 %v657, %v563
    %v660 = vadd.f32 %v654, %v658
    %v661 = vadd.f32 %v655, %v659
    %v662 = vadd.f32 %v632, %v660
    %v663 = vadd.f32 %v633, %v661
    %s664 = sld [smem:[#allocation2 + $0x41]]
    %v665 = vstv %s664
    %v666 = vmul.f32 %v665, %v544
    %v667 = vmul.f32 %v665, %v545
    %s668 = sld [smem:[#allocation2 + $0x42]]
    %v669 = vstv %s668
    %v670 = vmul.f32 %v669, %v550
    %v671 = vmul.f32 %v669, %v551
    %v672 = vadd.f32 %v666, %v670
    %v673 = vadd.f32 %v667, %v671
    %s674 = sld [smem:[#allocation2 + $0x43]]
    %v675 = vstv %s674
    %v676 = vmul.f32 %v675, %v538
    %v677 = vmul.f32 %v675, %v539
    %v678 = vadd.f32 %v672, %v676
    %v679 = vadd.f32 %v673, %v677
    %s680 = sld [smem:[#allocation2 + $0x44]]
    %v681 = vstv %s680
    %v682 = vmul.f32 %v681, %v556
    %v683 = vmul.f32 %v681, %v557
    %v684 = vadd.f32 %v678, %v682
    %v685 = vadd.f32 %v679, %v683
    %s686 = sld [smem:[#allocation2 + $0x45]]
    %v687 = vstv %s686
    %v688 = vmul.f32 %v687, %v562
    %v689 = vmul.f32 %v687, %v563
    %v690 = vadd.f32 %v684, %v688
    %v691 = vadd.f32 %v685, %v689
    %v692 = vrot.slane %v690, 1
    %v693 = vrot.slane %v691, 1
    %v694 = vsel %vm268, %v692, %v693
    %v695 = vsel %vm268, %v693, %v692
    %v696 = vmul.f32 %v694, %v274
    %v697 = vmul.f32 %v695, %v279
    %v698 = vadd.f32 %v662, %v696
    %v699 = vadd.f32 %v663, %v697
    %s700 = sld [smem:[#allocation2 + $0x46]]
    %v701 = vstv %s700
    %v702 = vmul.f32 %v701, %v544
    %v703 = vmul.f32 %v701, %v545
    %s704 = sld [smem:[#allocation2 + $0x47]]
    %v705 = vstv %s704
    %v706 = vmul.f32 %v705, %v550
    %v707 = vmul.f32 %v705, %v551
    %v708 = vadd.f32 %v702, %v706
    %v709 = vadd.f32 %v703, %v707
    %s710 = sld [smem:[#allocation2 + $0x48]]
    %v711 = vstv %s710
    %v712 = vmul.f32 %v711, %v538
    %v713 = vmul.f32 %v711, %v539
    %v714 = vadd.f32 %v708, %v712
    %v715 = vadd.f32 %v709, %v713
    %s716 = sld [smem:[#allocation2 + $0x49]]
    %v717 = vstv %s716
    %v718 = vmul.f32 %v717, %v556
    %v719 = vmul.f32 %v717, %v557
    %v720 = vadd.f32 %v714, %v718
    %v721 = vadd.f32 %v715, %v719
    %s722 = sld [smem:[#allocation2 + $0x4a]]
    %v723 = vstv %s722
    %v724 = vmul.f32 %v723, %v562
    %v725 = vmul.f32 %v723, %v563
    %v726 = vadd.f32 %v720, %v724
    %v727 = vadd.f32 %v721, %v725
    %v728 = vrot.slane %v726, 2
    %v729 = vrot.slane %v727, 2
    %v730 = vsel %vm315, %v728, %v729
    %v731 = vsel %vm315, %v729, %v728
    %v732 = vmul.f32 %v730, %v321
    %v733 = vmul.f32 %v731, %v326
    %v734 = vadd.f32 %v698, %v732
    %v735 = vadd.f32 %v699, %v733
    %s736 = sld [smem:[#allocation5 + $0x2]]
    %v737 = vstv %s736
    %v738 = vadd.f32 %v734, %v737
    %v739 = vadd.f32 %v735, %v737
    %v740 = vmax.f32 %v738, 0.0
    %v741 = vmax.f32 %v739, 0.0
    %742 = vrot.lane.b32.xlu0 %v740, 2
    %v743 = vpop.permute.xlu0 %742
    %744 = vrot.lane.b32.xlu0 %v741, 2
    %v745 = vpop.permute.xlu0 %744
    %v746 = vmul.f32 %v743, %v74
    %v747 = vmul.f32 %v745, %v74
    %748 = vrot.lane.b32.xlu0 %v740, 1
    %v749 = vpop.permute.xlu0 %748
    %750 = vrot.lane.b32.xlu0 %v741, 1
    %v751 = vpop.permute.xlu0 %750
    %v752 = vmul.f32 %v749, %v86
    %v753 = vmul.f32 %v751, %v86
    %754 = vrot.lane.b32.xlu0 %v740, 127
    %v755 = vpop.permute.xlu0 %754
    %756 = vrot.lane.b32.xlu0 %v741, 127
    %v757 = vpop.permute.xlu0 %756
    %v758 = vmul.f32 %v755, %v98
    %v759 = vmul.f32 %v757, %v98
    %760 = vrot.lane.b32.xlu0 %v740, 126
    %v761 = vpop.permute.xlu0 %760
    %762 = vrot.lane.b32.xlu0 %v741, 126
    %v763 = vpop.permute.xlu0 %762
    %v764 = vmul.f32 %v761, %v110
    %v765 = vmul.f32 %v763, %v110
    %s766 = sld [smem:[#allocation2 + $0x4b]]
    %v767 = vstv %s766
    %v768 = vmul.f32 %v767, %v746
    %v769 = vmul.f32 %v767, %v747
    %s770 = sld [smem:[#allocation2 + $0x4c]]
    %v771 = vstv %s770
    %v772 = vmul.f32 %v771, %v752
    %v773 = vmul.f32 %v771, %v753
    %v774 = vadd.f32 %v768, %v772
    %v775 = vadd.f32 %v769, %v773
    %s776 = sld [smem:[#allocation2 + $0x4d]]
    %v777 = vstv %s776
    %v778 = vmul.f32 %v777, %v740
    %v779 = vmul.f32 %v777, %v741
    %v780 = vadd.f32 %v774, %v778
    %v781 = vadd.f32 %v775, %v779
    %s782 = sld [smem:[#allocation2 + $0x4e]]
    %v783 = vstv %s782
    %v784 = vmul.f32 %v783, %v758
    %v785 = vmul.f32 %v783, %v759
    %v786 = vadd.f32 %v780, %v784
    %v787 = vadd.f32 %v781, %v785
    %s788 = sld [smem:[#allocation2 + $0x4f]]
    %v789 = vstv %s788
    %v790 = vmul.f32 %v789, %v764
    %v791 = vmul.f32 %v789, %v765
    %v792 = vadd.f32 %v786, %v790
    %v793 = vadd.f32 %v787, %v791
    %v794 = vrot.slane %v792, 6
    %v795 = vrot.slane %v793, 6
    %v796 = vsel %vm146, %v794, %v795
    %v797 = vsel %vm146, %v795, %v794
    %v798 = vmul.f32 %v797, %v152
    %v799 = vmul.f32 %v796, %v157
    %s800 = sld [smem:[#allocation2 + $0x50]]
    %v801 = vstv %s800
    %v802 = vmul.f32 %v801, %v746
    %v803 = vmul.f32 %v801, %v747
    %s804 = sld [smem:[#allocation2 + $0x51]]
    %v805 = vstv %s804
    %v806 = vmul.f32 %v805, %v752
    %v807 = vmul.f32 %v805, %v753
    %v808 = vadd.f32 %v802, %v806
    %v809 = vadd.f32 %v803, %v807
    %s810 = sld [smem:[#allocation2 + $0x52]]
    %v811 = vstv %s810
    %v812 = vmul.f32 %v811, %v740
    %v813 = vmul.f32 %v811, %v741
    %v814 = vadd.f32 %v808, %v812
    %v815 = vadd.f32 %v809, %v813
    %s816 = sld [smem:[#allocation2 + $0x53]]
    %v817 = vstv %s816
    %v818 = vmul.f32 %v817, %v758
    %v819 = vmul.f32 %v817, %v759
    %v820 = vadd.f32 %v814, %v818
    %v821 = vadd.f32 %v815, %v819
    %s822 = sld [smem:[#allocation2 + $0x54]]
    %v823 = vstv %s822
    %v824 = vmul.f32 %v823, %v764
    %v825 = vmul.f32 %v823, %v765
    %v826 = vadd.f32 %v820, %v824
    %v827 = vadd.f32 %v821, %v825
    %v828 = vrot.slane %v826, 7
    %v829 = vrot.slane %v827, 7
    %v830 = vsel %vm191, %v828, %v829
    %v831 = vsel %vm191, %v829, %v828
    %v832 = vmul.f32 %v831, %v197
    %v833 = vmul.f32 %v830, %v202
    %v834 = vadd.f32 %v798, %v832
    %v835 = vadd.f32 %v799, %v833
    %s836 = sld [smem:[#allocation2 + $0x55]]
    %v837 = vstv %s836
    %v838 = vmul.f32 %v837, %v746
    %v839 = vmul.f32 %v837, %v747
    %s840 = sld [smem:[#allocation2 + $0x56]]
    %v841 = vstv %s840
    %v842 = vmul.f32 %v841, %v752
    %v843 = vmul.f32 %v841, %v753
    %v844 = vadd.f32 %v838, %v842
    %v845 = vadd.f32 %v839, %v843
    %s846 = sld [smem:[#allocation2 + $0x57]]
    %v847 = vstv %s846
    %v848 = vmul.f32 %v847, %v740
    %v849 = vmul.f32 %v847, %v741
    %v850 = vadd.f32 %v844, %v848
    %v851 = vadd.f32 %v845, %v849
    %s852 = sld [smem:[#allocation2 + $0x58]]
    %v853 = vstv %s852
    %v854 = vmul.f32 %v853, %v758
    %v855 = vmul.f32 %v853, %v759
    %v856 = vadd.f32 %v850, %v854
    %v857 = vadd.f32 %v851, %v855
    %s858 = sld [smem:[#allocation2 + $0x59]]
    %v859 = vstv %s858
    %v860 = vmul.f32 %v859, %v764
    %v861 = vmul.f32 %v859, %v765
    %v862 = vadd.f32 %v856, %v860
    %v863 = vadd.f32 %v857, %v861
    %v864 = vadd.f32 %v834, %v862
    %v865 = vadd.f32 %v835, %v863
    %s866 = sld [smem:[#allocation2 + $0x5a]]
    %v867 = vstv %s866
    %v868 = vmul.f32 %v867, %v746
    %v869 = vmul.f32 %v867, %v747
    %s870 = sld [smem:[#allocation2 + $0x5b]]
    %v871 = vstv %s870
    %v872 = vmul.f32 %v871, %v752
    %v873 = vmul.f32 %v871, %v753
    %v874 = vadd.f32 %v868, %v872
    %v875 = vadd.f32 %v869, %v873
    %s876 = sld [smem:[#allocation2 + $0x5c]]
    %v877 = vstv %s876
    %v878 = vmul.f32 %v877, %v740
    %v879 = vmul.f32 %v877, %v741
    %v880 = vadd.f32 %v874, %v878
    %v881 = vadd.f32 %v875, %v879
    %s882 = sld [smem:[#allocation2 + $0x5d]]
    %v883 = vstv %s882
    %v884 = vmul.f32 %v883, %v758
    %v885 = vmul.f32 %v883, %v759
    %v886 = vadd.f32 %v880, %v884
    %v887 = vadd.f32 %v881, %v885
    %s888 = sld [smem:[#allocation2 + $0x5e]]
    %v889 = vstv %s888
    %v890 = vmul.f32 %v889, %v764
    %v891 = vmul.f32 %v889, %v765
    %v892 = vadd.f32 %v886, %v890
    %v893 = vadd.f32 %v887, %v891
    %v894 = vrot.slane %v892, 1
    %v895 = vrot.slane %v893, 1
    %v896 = vsel %vm268, %v894, %v895
    %v897 = vsel %vm268, %v895, %v894
    %v898 = vmul.f32 %v896, %v274
    %v899 = vmul.f32 %v897, %v279
    %v900 = vadd.f32 %v864, %v898
    %v901 = vadd.f32 %v865, %v899
    %s902 = sld [smem:[#allocation2 + $0x5f]]
    %v903 = vstv %s902
    %v904 = vmul.f32 %v903, %v746
    %v905 = vmul.f32 %v903, %v747
    %s906 = sld [smem:[#allocation2 + $0x60]]
    %v907 = vstv %s906
    %v908 = vmul.f32 %v907, %v752
    %v909 = vmul.f32 %v907, %v753
    %v910 = vadd.f32 %v904, %v908
    %v911 = vadd.f32 %v905, %v909
    %s912 = sld [smem:[#allocation2 + $0x61]]
    %v913 = vstv %s912
    %v914 = vmul.f32 %v913, %v740
    %v915 = vmul.f32 %v913, %v741
    %v916 = vadd.f32 %v910, %v914
    %v917 = vadd.f32 %v911, %v915
    %s918 = sld [smem:[#allocation2 + $0x62]]
    %v919 = vstv %s918
    %v920 = vmul.f32 %v919, %v758
    %v921 = vmul.f32 %v919, %v759
    %v922 = vadd.f32 %v916, %v920
    %v923 = vadd.f32 %v917, %v921
    %s924 = sld [smem:[#allocation2 + $0x63]]
    %v925 = vstv %s924
    %v926 = vmul.f32 %v925, %v764
    %v927 = vmul.f32 %v925, %v765
    %v928 = vadd.f32 %v922, %v926
    %v929 = vadd.f32 %v923, %v927
    %v930 = vrot.slane %v928, 2
    %v931 = vrot.slane %v929, 2
    %v932 = vsel %vm315, %v930, %v931
    %v933 = vsel %vm315, %v931, %v930
    %v934 = vmul.f32 %v932, %v321
    %v935 = vmul.f32 %v933, %v326
    %v936 = vadd.f32 %v900, %v934
    %v937 = vadd.f32 %v901, %v935
    %s938 = sld [smem:[#allocation5 + $0x3]]
    %v939 = vstv %s938
    %v940 = vadd.f32 %v936, %v939
    %v941 = vadd.f32 %v937, %v939
    %v942 = vmax.f32 %v940, 0.0
    %v943 = vmax.f32 %v941, 0.0
    %944 = vst [vmem:[#allocation7] sm:$0xff] %v942
    %945 = vst [vmem:[#allocation7 + $0x8] sm:$0xff] %v943
    // Predicated region
    $region30: #{tpu_custom_call.1} parent=1 // pred_check
      _
    $region31: #{tpu_custom_call.1} parent=1 // pred_check_branch
      %947 = sbr.rel (0) target = $region33
    $region32: #{tpu_custom_call.1} parent=1 // pred_region
      %s949 = ssub.s32 256, 256
      %950 = vsyncadd [#allocation3], %s949
      %s951 = sshll.u32 [#allocation7], 4
      %s952 = int_to_ptr.vmem [resolvable:$true] %s951
      %957 = dma.vmem_to_hbm [thread:$0]  %s952, 256, %s5, [#allocation3], 128, 128, 8
    $region33: #{tpu_custom_call.1} parent=1 // pred_fallthru
      _
    // Predicated region
    $region34: #{tpu_custom_call.1} parent=1 // pred_check
      _
    $region35: #{tpu_custom_call.1} parent=1 // pred_check_branch
      %959 = sbr.rel (0) target = $region37
    $region36: #{tpu_custom_call.1} parent=1 // pred_region
      %960 = dma.done [#allocation3], 256
    $region37: #{tpu_custom_call.1} parent=1 // pred_fallthru
      _
    %961 = vsyncpa [#allocation3], 1
    %962 = vsyncpa [#allocation4], 1
    %963 = vsyncpa [#allocation6], 1

</llo_original>
